<compile_context>
chip_gen: v7x
topology: tpu7x:2x2x1
jax: 0.10.0
libtpu: 0.0.40
codegen_flags: <defaults>
</compile_context>

<pallas_src>
import functools

import jax
import jax.numpy as jnp
from jax.experimental import pallas as pl
from jax.experimental.pallas import tpu as pltpu

CIN = 16
COUT = 16
KH = KW = 2
STRIDE = 2
K = CIN * KH * KW  # 64


def reference(x_nchw, weight, bias):
    """Pure-JAX f32 reference: dense conv (groups=1) + v1 * sigmoid(v1)."""
    v1 = jax.lax.conv_general_dilated(
        x_nchw, weight, window_strides=(STRIDE, STRIDE), padding="VALID",
        dimension_numbers=("NCHW", "OIHW", "NCHW"))
    v1 = v1 + bias.reshape(1, COUT, 1, 1)
    return v1 * jax.nn.sigmoid(v1)


# --------------------------------------------------------------------------- #
# Primary: fused in-kernel patch extraction (stride-2 lane slices) + matmul + SiLU
# --------------------------------------------------------------------------- #
def _fused_kernel(w_ref, b_ref, x_ref, o_ref, *, th, w_in, wo):
    # w_ref: (COUT, K)       bf16, resident (constant index_map)
    # b_ref: (COUT, 1)       f32,  resident
    # x_ref: (CIN, th, 2W)   f32   row-block of x viewed as (N, C, Ho, 2W)
    # o_ref: (COUT, th, Wo)  out   NCHW row-block (written directly, no transpose)
    w = w_ref[...]
    b = b_ref[...]
    for r in range(th):  # static unroll: one (16,64)x(64,Wo) MXU matmul per output row
        taps = [
            x_ref[:, r, pl.ds(kh * w_in + kw, wo, stride=2)]  # (CIN, Wo) f32
            for kh in range(KH)
            for kw in range(KW)
        ]
        p = jnp.concatenate(taps, axis=0).astype(jnp.bfloat16)       # (K, Wo)
        v = jnp.dot(w, p, preferred_element_type=jnp.float32) + b    # (COUT, Wo) f32
        o_ref[:, r, :] = (v * jax.nn.sigmoid(v)).astype(o_ref.dtype)


def _pick_row_tile(ho, w_in, n_batch):
    """Output-row tile: largest divisor of Ho (<=128, %8==0 or ==Ho) whose f32 input
    block (16, th, 2W) stays <= ~1.5 MiB; only split further to reach >=2 grid steps."""
    budget = 1536 * 1024
    cands = [t for t in range(1, ho + 1)
             if ho % t == 0 and t <= 128 and (t % 8 == 0 or t == ho)]
    if not cands:  # odd Ho: any divisor (the probe falls back to two-pass if rejected)
        cands = [t for t in range(1, ho + 1) if ho % t == 0 and t <= 128]
    fitting = [t for t in cands if 128 * t * w_in <= budget]
    th = max(fitting) if fitting else min(cands)
    while n_batch * (ho // th) < 2 and th % 2 == 0 and (th // 2) in cands:
        th //= 2
    return th


@functools.partial(jax.jit, static_argnames=("out_dtype",))
def _conv_silu_fused(x_nchw, weight, bias, out_dtype=jnp.float32):
    n, c, h, w_in = x_nchw.shape
    assert c == CIN and h % STRIDE == 0 and w_in % STRIDE == 0
    ho, wo = h // STRIDE, w_in // STRIDE

    # Free view (no data movement): (N, C, H, W) -> (N, C, Ho, 2W); lane l = kh*W + w,
    # so tap (kh, kw) of output column wo sits at lane kh*W + kw + 2*wo.
    x_view = x_nchw.reshape(n, CIN, ho, 2 * w_in)

    # Weight rows ordered (kh, kw, ci) to match the in-kernel tap concatenation.
    w_mat = jnp.transpose(weight, (0, 2, 3, 1)).reshape(COUT, K).astype(jnp.bfloat16)
    b_col = bias.reshape(COUT, 1).astype(jnp.float32)

    th = _pick_row_tile(ho, w_in, n)
    grid = (n, ho // th)

    kernel = functools.partial(_fused_kernel, th=th, w_in=w_in, wo=wo)
    return pl.pallas_call(
        kernel,
        out_shape=jax.ShapeDtypeStruct((n, COUT, ho, wo), out_dtype),
        grid_spec=pltpu.PrefetchScalarGridSpec(
            num_scalar_prefetch=0,
            grid=grid,
            in_specs=[
                pl.BlockSpec((COUT, K), lambda i, j: (0, 0)),   # weight (resident)
                pl.BlockSpec((COUT, 1), lambda i, j: (0, 0)),   # bias   (resident)
                pl.BlockSpec((None, CIN, th, 2 * w_in), lambda i, j: (i, 0, j, 0)),
            ],
            out_specs=pl.BlockSpec((None, COUT, th, wo), lambda i, j: (i, 0, j, 0)),
        ),
        compiler_params=pltpu.CompilerParams(
            dimension_semantics=("parallel", "parallel")),
    )(w_mat, b_col, x_view)


# --------------------------------------------------------------------------- #
# Fallback: lane-dense XLA im2col (4 strided slices) + matmul + SiLU kernel
# --------------------------------------------------------------------------- #
def _matmul_silu_kernel(w_ref, b_ref, p_ref, o_ref):
    # w_ref: (COUT, K) bf16 resident; b_ref: (COUT, 1) f32 resident
    # p_ref: (K, tm) bf16 patch tile;  o_ref: (COUT, tm) lane-dense NCHW-ordered output
    v = jnp.dot(w_ref[...], p_ref[...], preferred_element_type=jnp.float32) + b_ref[...]
    o_ref[...] = (v * jax.nn.sigmoid(v)).astype(o_ref.dtype)


@functools.partial(jax.jit, static_argnames=("out_dtype",))
def _conv_silu_two_pass(x_nchw, weight, bias, out_dtype=jnp.float32):
    n, c, h, w_in = x_nchw.shape
    assert c == CIN and h % STRIDE == 0 and w_in % STRIDE == 0
    ho, wo = h // STRIDE, w_in // STRIDE
    m = ho * wo

    # Lane-dense im2col from four strided slices, tap-major (kh, kw, ci), bf16 stream.
    taps = [x_nchw[:, :, kh::STRIDE, kw::STRIDE]
            for kh in range(KH) for kw in range(KW)]              # 4 x (N, C, Ho, Wo)
    patches = jnp.stack(taps, axis=1).astype(jnp.bfloat16).reshape(n, K, m)

    # Spatial tile: multiple of 128, capped at 4096; pad the flat spatial axis instead
    # of ever using a full-extent block (VMEM hazard on large odd extents).
    tm = max(128, min(4096, pl.next_power_of_2(m) // 2))
    m_pad = pl.cdiv(m, tm) * tm
    if m_pad != m:
        patches = jnp.pad(patches, ((0, 0), (0, 0), (0, m_pad - m)))

    w_mat = jnp.transpose(weight, (0, 2, 3, 1)).reshape(COUT, K).astype(jnp.bfloat16)
    b_col = bias.reshape(COUT, 1).astype(jnp.float32)

    out_flat = pl.pallas_call(
        _matmul_silu_kernel,
        out_shape=jax.ShapeDtypeStruct((n, COUT, m_pad), out_dtype),
        grid_spec=pltpu.PrefetchScalarGridSpec(
            num_scalar_prefetch=0,
            grid=(n, m_pad // tm),
            in_specs=[
                pl.BlockSpec((COUT, K), lambda i, j: (0, 0)),     # weight (resident)
                pl.BlockSpec((COUT, 1), lambda i, j: (0, 0)),     # bias   (resident)
                pl.BlockSpec((None, K, tm), lambda i, j: (i, 0, j)),
            ],
            out_specs=pl.BlockSpec((None, COUT, tm), lambda i, j: (i, 0, j)),
        ),
        compiler_params=pltpu.CompilerParams(
            dimension_semantics=("parallel", "parallel")),
    )(w_mat, b_col, patches)

    return out_flat[:, :, :m].reshape(n, COUT, ho, wo)


# --------------------------------------------------------------------------- #
# Public wrapper with a one-time capability probe for the fused path.
# --------------------------------------------------------------------------- #
_USE_FUSED = None  # resolved on first call: strided lane loads must lower AND validate


def conv2d_silu_pallas(x_nchw, weight, bias, out_dtype=jnp.float32):
    """Conv2d(16,16,(2,2),stride=2) + v*sigmoid(v); NCHW in / NCHW out."""
    global _USE_FUSED
    if _USE_FUSED is None:
        try:
            out = jax.block_until_ready(
                _conv_silu_fused(x_nchw, weight, bias, out_dtype=out_dtype))
            ref = reference(x_nchw, weight, bias).astype(out_dtype)
            _USE_FUSED = bool(jnp.allclose(out, ref, atol=2.5e-2, rtol=2.5e-2))
            if _USE_FUSED:
                return out
        except Exception:
            # Strided lane loads not supported by this jax/libtpu -> two-pass fallback.
            _USE_FUSED = False
    if _USE_FUSED:
        return _conv_silu_fused(x_nchw, weight, bias, out_dtype=out_dtype)
    return _conv_silu_two_pass(x_nchw, weight, bias, out_dtype=out_dtype)


if __name__ == "__main__":
    key = jax.random.PRNGKey(0)
    kx, kw_key, kb = jax.random.split(key, 3)

    # Channels are fixed at 16 by the conv; keep batch/spatial small for the smoke test.
    x = jax.random.normal(kx, (2, 16, 32, 32), dtype=jnp.float32)

    # Deterministic PyTorch-like uniform fan-in init.
    fan_in = CIN * KH * KW
    bound = 1.0 / (fan_in ** 0.5)
    weight = jax.random.uniform(kw_key, (COUT, CIN, KH, KW), jnp.float32, -bound, bound)
    bias = jax.random.uniform(kb, (COUT,), jnp.float32, -bound, bound)

    out = jax.block_until_ready(conv2d_silu_pallas(x, weight, bias))
    ref = jax.block_until_ready(reference(x, weight, bias))

    assert out.shape == (2, 16, 16, 16), out.shape
    # bf16 input/weight streams in the kernel (f32 accumulate/epilogue) -> relaxed tol.
    max_err = float(jnp.max(jnp.abs(out - ref)))
    assert jnp.allclose(out, ref, atol=2.5e-2, rtol=2.5e-2), max_err

    print("KERNEL_OK")
</pallas_src>

<mosaic_0001>
module attributes {stable_mosaic.version = 11 : i64} {
  func.func @_fused_kernel(%arg0: i32, %arg1: i32, %arg2: memref<16x64xbf16, #tpu.memory_space<vmem>>, %arg3: memref<16x1xf32, #tpu.memory_space<vmem>>, %arg4: memref<1x16x16x64xf32, #tpu.memory_space<vmem>>, %arg5: memref<1x16x16x16xf32, #tpu.memory_space<vmem>>) attributes {dimension_semantics = [#tpu.dimension_semantics<parallel>, #tpu.dimension_semantics<parallel>], iteration_bounds = array<i64: 2, 1>, scalar_prefetch = 0 : i64, scratch_operands = 0 : i64, tpu.core_type = #tpu.core_type<tc>, window_params = [{pipeline_mode = #tpu.pipeline_mode<synchronous>, transform_indices = @transform_0, window_bounds = array<i64: 16, 64>}, {pipeline_mode = #tpu.pipeline_mode<synchronous>, transform_indices = @transform_1, window_bounds = array<i64: 16, 1>}, {transform_indices = @transform_2, window_bounds = array<i64: 1, 16, 16, 64>}, {transform_indices = @transform_3, window_bounds = array<i64: 1, 16, 16, 16>}]} {
    %c0 = arith.constant 0 : index
    %c0_0 = arith.constant 0 : index
    %0 = vector.load %arg2[%c0, %c0_0] : memref<16x64xbf16, #tpu.memory_space<vmem>>, vector<16x64xbf16>
    %c0_1 = arith.constant 0 : index
    %c0_2 = arith.constant 0 : index
    %1 = vector.load %arg3[%c0_1, %c0_2] : memref<16x1xf32, #tpu.memory_space<vmem>>, vector<16x1xf32>
    %c0_3 = arith.constant 0 : index
    %c0_4 = arith.constant 0 : index
    %c0_5 = arith.constant 0 : index
    %c0_6 = arith.constant 0 : index
    %2 = tpu.strided_load %arg4[%c0_3, %c0_4, %c0_5, %c0_6] {strides = array<i32: 1, 1, 1, 2>} : memref<1x16x16x64xf32, #tpu.memory_space<vmem>>, vector<1x16x1x16xf32>
    %3 = vector.shape_cast %2 : vector<1x16x1x16xf32> to vector<16x16xf32>
    %c0_7 = arith.constant 0 : index
    %c0_8 = arith.constant 0 : index
    %c0_9 = arith.constant 0 : index
    %c1 = arith.constant 1 : index
    %4 = tpu.strided_load %arg4[%c0_7, %c0_8, %c0_9, %c1] {strides = array<i32: 1, 1, 1, 2>} : memref<1x16x16x64xf32, #tpu.memory_space<vmem>>, vector<1x16x1x16xf32>
    %5 = vector.shape_cast %4 : vector<1x16x1x16xf32> to vector<16x16xf32>
    %c0_10 = arith.constant 0 : index
    %c0_11 = arith.constant 0 : index
    %c0_12 = arith.constant 0 : index
    %c32 = arith.constant 32 : index
    %6 = tpu.strided_load %arg4[%c0_10, %c0_11, %c0_12, %c32] {strides = array<i32: 1, 1, 1, 2>} : memref<1x16x16x64xf32, #tpu.memory_space<vmem>>, vector<1x16x1x16xf32>
    %7 = vector.shape_cast %6 : vector<1x16x1x16xf32> to vector<16x16xf32>
    %c0_13 = arith.constant 0 : index
    %c0_14 = arith.constant 0 : index
    %c0_15 = arith.constant 0 : index
    %c33 = arith.constant 33 : index
    %8 = tpu.strided_load %arg4[%c0_13, %c0_14, %c0_15, %c33] {strides = array<i32: 1, 1, 1, 2>} : memref<1x16x16x64xf32, #tpu.memory_space<vmem>>, vector<1x16x1x16xf32>
    %9 = vector.shape_cast %8 : vector<1x16x1x16xf32> to vector<16x16xf32>
    %10 = tpu.concatenate %3, %5, %7, %9 in 0 : vector<16x16xf32>, vector<16x16xf32>, vector<16x16xf32>, vector<16x16xf32> -> vector<64x16xf32>
    %11 = arith.truncf %10 : vector<64x16xf32> to vector<64x16xbf16>
    %cst = arith.constant dense<0.000000e+00> : vector<16x16xf32>
    %12 = tpu.matmul %0, %11, %cst {dimension_numbers = #tpu.dot_dimension_numbers<[1], [0], [0], [1], [0, 0, 1, 1], [], []>} : vector<16x64xbf16>, vector<64x16xbf16>, vector<16x16xf32> -> vector<16x16xf32>
    %13 = vector.broadcast %1 : vector<16x1xf32> to vector<16x16xf32>
    %14 = arith.addf %12, %13 : vector<16x16xf32>
    %15 = arith.negf %14 : vector<16x16xf32>
    %16 = math.exp %15 : vector<16x16xf32>
    %cst_16 = arith.constant 1.000000e+00 : f32
    %17 = vector.broadcast %cst_16 : f32 to vector<16x16xf32>
    %18 = arith.addf %17, %16 : vector<16x16xf32>
    %19 = arith.divf %17, %18 : vector<16x16xf32>
    %20 = arith.mulf %14, %19 : vector<16x16xf32>
    %c0_17 = arith.constant 0 : index
    %c0_18 = arith.constant 0 : index
    %c0_19 = arith.constant 0 : index
    %c0_20 = arith.constant 0 : index
    %21 = vector.load %arg5[%c0_17, %c0_18, %c0_19, %c0_20] : memref<1x16x16x16xf32, #tpu.memory_space<vmem>>, vector<1x16x1x16xf32>
    %22 = vector.shape_cast %21 : vector<1x16x1x16xf32> to vector<16x16xf32>
    %23 = vector.shape_cast %20 : vector<16x16xf32> to vector<1x16x1x16xf32>
    tpu.vector_store %arg5[%c0_17, %c0_18, %c0_19, %c0_20], %23 {strides = array<i32>} : memref<1x16x16x16xf32, #tpu.memory_space<vmem>>, vector<1x16x1x16xf32>,
    %c0_21 = arith.constant 0 : index
    %c0_22 = arith.constant 0 : index
    %c1_23 = arith.constant 1 : index
    %c0_24 = arith.constant 0 : index
    %24 = tpu.strided_load %arg4[%c0_21, %c0_22, %c1_23, %c0_24] {strides = array<i32: 1, 1, 1, 2>} : memref<1x16x16x64xf32, #tpu.memory_space<vmem>>, vector<1x16x1x16xf32>
    %25 = vector.shape_cast %24 : vector<1x16x1x16xf32> to vector<16x16xf32>
    %c0_25 = arith.constant 0 : index
    %c0_26 = arith.constant 0 : index
    %c1_27 = arith.constant 1 : index
    %c1_28 = arith.constant 1 : index
    %26 = tpu.strided_load %arg4[%c0_25, %c0_26, %c1_27, %c1_28] {strides = array<i32: 1, 1, 1, 2>} : memref<1x16x16x64xf32, #tpu.memory_space<vmem>>, vector<1x16x1x16xf32>
    %27 = vector.shape_cast %26 : vector<1x16x1x16xf32> to vector<16x16xf32>
    %c0_29 = arith.constant 0 : index
    %c0_30 = arith.constant 0 : index
    %c1_31 = arith.constant 1 : index
    %c32_32 = arith.constant 32 : index
    %28 = tpu.strided_load %arg4[%c0_29, %c0_30, %c1_31, %c32_32] {strides = array<i32: 1, 1, 1, 2>} : memref<1x16x16x64xf32, #tpu.memory_space<vmem>>, vector<1x16x1x16xf32>
    %29 = vector.shape_cast %28 : vector<1x16x1x16xf32> to vector<16x16xf32>
    %c0_33 = arith.constant 0 : index
    %c0_34 = arith.constant 0 : index
    %c1_35 = arith.constant 1 : index
    %c33_36 = arith.constant 33 : index
    %30 = tpu.strided_load %arg4[%c0_33, %c0_34, %c1_35, %c33_36] {strides = array<i32: 1, 1, 1, 2>} : memref<1x16x16x64xf32, #tpu.memory_space<vmem>>, vector<1x16x1x16xf32>
    %31 = vector.shape_cast %30 : vector<1x16x1x16xf32> to vector<16x16xf32>
    %32 = tpu.concatenate %25, %27, %29, %31 in 0 : vector<16x16xf32>, vector<16x16xf32>, vector<16x16xf32>, vector<16x16xf32> -> vector<64x16xf32>
    %33 = arith.truncf %32 : vector<64x16xf32> to vector<64x16xbf16>
    %cst_37 = arith.constant dense<0.000000e+00> : vector<16x16xf32>
    %34 = tpu.matmul %0, %33, %cst_37 {dimension_numbers = #tpu.dot_dimension_numbers<[1], [0], [0], [1], [0, 0, 1, 1], [], []>} : vector<16x64xbf16>, vector<64x16xbf16>, vector<16x16xf32> -> vector<16x16xf32>
    %35 = vector.broadcast %1 : vector<16x1xf32> to vector<16x16xf32>
    %36 = arith.addf %34, %35 : vector<16x16xf32>
    %37 = arith.negf %36 : vector<16x16xf32>
    %38 = math.exp %37 : vector<16x16xf32>
    %cst_38 = arith.constant 1.000000e+00 : f32
    %39 = vector.broadcast %cst_38 : f32 to vector<16x16xf32>
    %40 = arith.addf %39, %38 : vector<16x16xf32>
    %41 = arith.divf %39, %40 : vector<16x16xf32>
    %42 = arith.mulf %36, %41 : vector<16x16xf32>
    %c0_39 = arith.constant 0 : index
    %c0_40 = arith.constant 0 : index
    %c1_41 = arith.constant 1 : index
    %c0_42 = arith.constant 0 : index
    %43 = vector.load %arg5[%c0_39, %c0_40, %c1_41, %c0_42] : memref<1x16x16x16xf32, #tpu.memory_space<vmem>>, vector<1x16x1x16xf32>
    %44 = vector.shape_cast %43 : vector<1x16x1x16xf32> to vector<16x16xf32>
    %45 = vector.shape_cast %42 : vector<16x16xf32> to vector<1x16x1x16xf32>
    tpu.vector_store %arg5[%c0_39, %c0_40, %c1_41, %c0_42], %45 {strides = array<i32>} : memref<1x16x16x16xf32, #tpu.memory_space<vmem>>, vector<1x16x1x16xf32>,
    %c0_43 = arith.constant 0 : index
    %c0_44 = arith.constant 0 : index
    %c2 = arith.constant 2 : index
    %c0_45 = arith.constant 0 : index
    %46 = tpu.strided_load %arg4[%c0_43, %c0_44, %c2, %c0_45] {strides = array<i32: 1, 1, 1, 2>} : memref<1x16x16x64xf32, #tpu.memory_space<vmem>>, vector<1x16x1x16xf32>
    %47 = vector.shape_cast %46 : vector<1x16x1x16xf32> to vector<16x16xf32>
    %c0_46 = arith.constant 0 : index
    %c0_47 = arith.constant 0 : index
    %c2_48 = arith.constant 2 : index
    %c1_49 = arith.constant 1 : index
    %48 = tpu.strided_load %arg4[%c0_46, %c0_47, %c2_48, %c1_49] {strides = array<i32: 1, 1, 1, 2>} : memref<1x16x16x64xf32, #tpu.memory_space<vmem>>, vector<1x16x1x16xf32>
    %49 = vector.shape_cast %48 : vector<1x16x1x16xf32> to vector<16x16xf32>
    %c0_50 = arith.constant 0 : index
    %c0_51 = arith.constant 0 : index
    %c2_52 = arith.constant 2 : index
    %c32_53 = arith.constant 32 : index
    %50 = tpu.strided_load %arg4[%c0_50, %c0_51, %c2_52, %c32_53] {strides = array<i32: 1, 1, 1, 2>} : memref<1x16x16x64xf32, #tpu.memory_space<vmem>>, vector<1x16x1x16xf32>
    %51 = vector.shape_cast %50 : vector<1x16x1x16xf32> to vector<16x16xf32>
    %c0_54 = arith.constant 0 : index
    %c0_55 = arith.constant 0 : index
    %c2_56 = arith.constant 2 : index
    %c33_57 = arith.constant 33 : index
    %52 = tpu.strided_load %arg4[%c0_54, %c0_55, %c2_56, %c33_57] {strides = array<i32: 1, 1, 1, 2>} : memref<1x16x16x64xf32, #tpu.memory_space<vmem>>, vector<1x16x1x16xf32>
    %53 = vector.shape_cast %52 : vector<1x16x1x16xf32> to vector<16x16xf32>
    %54 = tpu.concatenate %47, %49, %51, %53 in 0 : vector<16x16xf32>, vector<16x16xf32>, vector<16x16xf32>, vector<16x16xf32> -> vector<64x16xf32>
    %55 = arith.truncf %54 : vector<64x16xf32> to vector<64x16xbf16>
    %cst_58 = arith.constant dense<0.000000e+00> : vector<16x16xf32>
    %56 = tpu.matmul %0, %55, %cst_58 {dimension_numbers = #tpu.dot_dimension_numbers<[1], [0], [0], [1], [0, 0, 1, 1], [], []>} : vector<16x64xbf16>, vector<64x16xbf16>, vector<16x16xf32> -> vector<16x16xf32>
    %57 = vector.broadcast %1 : vector<16x1xf32> to vector<16x16xf32>
    %58 = arith.addf %56, %57 : vector<16x16xf32>
    %59 = arith.negf %58 : vector<16x16xf32>
    %60 = math.exp %59 : vector<16x16xf32>
    %cst_59 = arith.constant 1.000000e+00 : f32
    %61 = vector.broadcast %cst_59 : f32 to vector<16x16xf32>
    %62 = arith.addf %61, %60 : vector<16x16xf32>
    %63 = arith.divf %61, %62 : vector<16x16xf32>
    %64 = arith.mulf %58, %63 : vector<16x16xf32>
    %c0_60 = arith.constant 0 : index
    %c0_61 = arith.constant 0 : index
    %c2_62 = arith.constant 2 : index
    %c0_63 = arith.constant 0 : index
    %65 = vector.load %arg5[%c0_60, %c0_61, %c2_62, %c0_63] : memref<1x16x16x16xf32, #tpu.memory_space<vmem>>, vector<1x16x1x16xf32>
    %66 = vector.shape_cast %65 : vector<1x16x1x16xf32> to vector<16x16xf32>
    %67 = vector.shape_cast %64 : vector<16x16xf32> to vector<1x16x1x16xf32>
    tpu.vector_store %arg5[%c0_60, %c0_61, %c2_62, %c0_63], %67 {strides = array<i32>} : memref<1x16x16x16xf32, #tpu.memory_space<vmem>>, vector<1x16x1x16xf32>,
    %c0_64 = arith.constant 0 : index
    %c0_65 = arith.constant 0 : index
    %c3 = arith.constant 3 : index
    %c0_66 = arith.constant 0 : index
    %68 = tpu.strided_load %arg4[%c0_64, %c0_65, %c3, %c0_66] {strides = array<i32: 1, 1, 1, 2>} : memref<1x16x16x64xf32, #tpu.memory_space<vmem>>, vector<1x16x1x16xf32>
    %69 = vector.shape_cast %68 : vector<1x16x1x16xf32> to vector<16x16xf32>
    %c0_67 = arith.constant 0 : index
    %c0_68 = arith.constant 0 : index
    %c3_69 = arith.constant 3 : index
    %c1_70 = arith.constant 1 : index
    %70 = tpu.strided_load %arg4[%c0_67, %c0_68, %c3_69, %c1_70] {strides = array<i32: 1, 1, 1, 2>} : memref<1x16x16x64xf32, #tpu.memory_space<vmem>>, vector<1x16x1x16xf32>
    %71 = vector.shape_cast %70 : vector<1x16x1x16xf32> to vector<16x16xf32>
    %c0_71 = arith.constant 0 : index
    %c0_72 = arith.constant 0 : index
    %c3_73 = arith.constant 3 : index
    %c32_74 = arith.constant 32 : index
    %72 = tpu.strided_load %arg4[%c0_71, %c0_72, %c3_73, %c32_74] {strides = array<i32: 1, 1, 1, 2>} : memref<1x16x16x64xf32, #tpu.memory_space<vmem>>, vector<1x16x1x16xf32>
    %73 = vector.shape_cast %72 : vector<1x16x1x16xf32> to vector<16x16xf32>
    %c0_75 = arith.constant 0 : index
    %c0_76 = arith.constant 0 : index
    %c3_77 = arith.constant 3 : index
    %c33_78 = arith.constant 33 : index
    %74 = tpu.strided_load %arg4[%c0_75, %c0_76, %c3_77, %c33_78] {strides = array<i32: 1, 1, 1, 2>} : memref<1x16x16x64xf32, #tpu.memory_space<vmem>>, vector<1x16x1x16xf32>
    %75 = vector.shape_cast %74 : vector<1x16x1x16xf32> to vector<16x16xf32>
    %76 = tpu.concatenate %69, %71, %73, %75 in 0 : vector<16x16xf32>, vector<16x16xf32>, vector<16x16xf32>, vector<16x16xf32> -> vector<64x16xf32>
    %77 = arith.truncf %76 : vector<64x16xf32> to vector<64x16xbf16>
    %cst_79 = arith.constant dense<0.000000e+00> : vector<16x16xf32>
    %78 = tpu.matmul %0, %77, %cst_79 {dimension_numbers = #tpu.dot_dimension_numbers<[1], [0], [0], [1], [0, 0, 1, 1], [], []>} : vector<16x64xbf16>, vector<64x16xbf16>, vector<16x16xf32> -> vector<16x16xf32>
    %79 = vector.broadcast %1 : vector<16x1xf32> to vector<16x16xf32>
    %80 = arith.addf %78, %79 : vector<16x16xf32>
    %81 = arith.negf %80 : vector<16x16xf32>
    %82 = math.exp %81 : vector<16x16xf32>
    %cst_80 = arith.constant 1.000000e+00 : f32
    %83 = vector.broadcast %cst_80 : f32 to vector<16x16xf32>
    %84 = arith.addf %83, %82 : vector<16x16xf32>
    %85 = arith.divf %83, %84 : vector<16x16xf32>
    %86 = arith.mulf %80, %85 : vector<16x16xf32>
    %c0_81 = arith.constant 0 : index
    %c0_82 = arith.constant 0 : index
    %c3_83 = arith.constant 3 : index
    %c0_84 = arith.constant 0 : index
    %87 = vector.load %arg5[%c0_81, %c0_82, %c3_83, %c0_84] : memref<1x16x16x16xf32, #tpu.memory_space<vmem>>, vector<1x16x1x16xf32>
    %88 = vector.shape_cast %87 : vector<1x16x1x16xf32> to vector<16x16xf32>
    %89 = vector.shape_cast %86 : vector<16x16xf32> to vector<1x16x1x16xf32>
    tpu.vector_store %arg5[%c0_81, %c0_82, %c3_83, %c0_84], %89 {strides = array<i32>} : memref<1x16x16x16xf32, #tpu.memory_space<vmem>>, vector<1x16x1x16xf32>,
    %c0_85 = arith.constant 0 : index
    %c0_86 = arith.constant 0 : index
    %c4 = arith.constant 4 : index
    %c0_87 = arith.constant 0 : index
    %90 = tpu.strided_load %arg4[%c0_85, %c0_86, %c4, %c0_87] {strides = array<i32: 1, 1, 1, 2>} : memref<1x16x16x64xf32, #tpu.memory_space<vmem>>, vector<1x16x1x16xf32>
    %91 = vector.shape_cast %90 : vector<1x16x1x16xf32> to vector<16x16xf32>
    %c0_88 = arith.constant 0 : index
    %c0_89 = arith.constant 0 : index
    %c4_90 = arith.constant 4 : index
    %c1_91 = arith.constant 1 : index
    %92 = tpu.strided_load %arg4[%c0_88, %c0_89, %c4_90, %c1_91] {strides = array<i32: 1, 1, 1, 2>} : memref<1x16x16x64xf32, #tpu.memory_space<vmem>>, vector<1x16x1x16xf32>
    %93 = vector.shape_cast %92 : vector<1x16x1x16xf32> to vector<16x16xf32>
    %c0_92 = arith.constant 0 : index
    %c0_93 = arith.constant 0 : index
    %c4_94 = arith.constant 4 : index
    %c32_95 = arith.constant 32 : index
    %94 = tpu.strided_load %arg4[%c0_92, %c0_93, %c4_94, %c32_95] {strides = array<i32: 1, 1, 1, 2>} : memref<1x16x16x64xf32, #tpu.memory_space<vmem>>, vector<1x16x1x16xf32>
    %95 = vector.shape_cast %94 : vector<1x16x1x16xf32> to vector<16x16xf32>
    %c0_96 = arith.constant 0 : index
    %c0_97 = arith.constant 0 : index
    %c4_98 = arith.constant 4 : index
    %c33_99 = arith.constant 33 : index
    %96 = tpu.strided_load %arg4[%c0_96, %c0_97, %c4_98, %c33_99] {strides = array<i32: 1, 1, 1, 2>} : memref<1x16x16x64xf32, #tpu.memory_space<vmem>>, vector<1x16x1x16xf32>
    %97 = vector.shape_cast %96 : vector<1x16x1x16xf32> to vector<16x16xf32>
    %98 = tpu.concatenate %91, %93, %95, %97 in 0 : vector<16x16xf32>, vector<16x16xf32>, vector<16x16xf32>, vector<16x16xf32> -> vector<64x16xf32>
    %99 = arith.truncf %98 : vector<64x16xf32> to vector<64x16xbf16>
    %cst_100 = arith.constant dense<0.000000e+00> : vector<16x16xf32>
    %100 = tpu.matmul %0, %99, %cst_100 {dimension_numbers = #tpu.dot_dimension_numbers<[1], [0], [0], [1], [0, 0, 1, 1], [], []>} : vector<16x64xbf16>, vector<64x16xbf16>, vector<16x16xf32> -> vector<16x16xf32>
    %101 = vector.broadcast %1 : vector<16x1xf32> to vector<16x16xf32>
    %102 = arith.addf %100, %101 : vector<16x16xf32>
    %103 = arith.negf %102 : vector<16x16xf32>
    %104 = math.exp %103 : vector<16x16xf32>
    %cst_101 = arith.constant 1.000000e+00 : f32
    %105 = vector.broadcast %cst_101 : f32 to vector<16x16xf32>
    %106 = arith.addf %105, %104 : vector<16x16xf32>
    %107 = arith.divf %105, %106 : vector<16x16xf32>
    %108 = arith.mulf %102, %107 : vector<16x16xf32>
    %c0_102 = arith.constant 0 : index
    %c0_103 = arith.constant 0 : index
    %c4_104 = arith.constant 4 : index
    %c0_105 = arith.constant 0 : index
    %109 = vector.load %arg5[%c0_102, %c0_103, %c4_104, %c0_105] : memref<1x16x16x16xf32, #tpu.memory_space<vmem>>, vector<1x16x1x16xf32>
    %110 = vector.shape_cast %109 : vector<1x16x1x16xf32> to vector<16x16xf32>
    %111 = vector.shape_cast %108 : vector<16x16xf32> to vector<1x16x1x16xf32>
    tpu.vector_store %arg5[%c0_102, %c0_103, %c4_104, %c0_105], %111 {strides = array<i32>} : memref<1x16x16x16xf32, #tpu.memory_space<vmem>>, vector<1x16x1x16xf32>,
    %c0_106 = arith.constant 0 : index
    %c0_107 = arith.constant 0 : index
    %c5 = arith.constant 5 : index
    %c0_108 = arith.constant 0 : index
    %112 = tpu.strided_load %arg4[%c0_106, %c0_107, %c5, %c0_108] {strides = array<i32: 1, 1, 1, 2>} : memref<1x16x16x64xf32, #tpu.memory_space<vmem>>, vector<1x16x1x16xf32>
    %113 = vector.shape_cast %112 : vector<1x16x1x16xf32> to vector<16x16xf32>
    %c0_109 = arith.constant 0 : index
    %c0_110 = arith.constant 0 : index
    %c5_111 = arith.constant 5 : index
    %c1_112 = arith.constant 1 : index
    %114 = tpu.strided_load %arg4[%c0_109, %c0_110, %c5_111, %c1_112] {strides = array<i32: 1, 1, 1, 2>} : memref<1x16x16x64xf32, #tpu.memory_space<vmem>>, vector<1x16x1x16xf32>
    %115 = vector.shape_cast %114 : vector<1x16x1x16xf32> to vector<16x16xf32>
    %c0_113 = arith.constant 0 : index
    %c0_114 = arith.constant 0 : index
    %c5_115 = arith.constant 5 : index
    %c32_116 = arith.constant 32 : index
    %116 = tpu.strided_load %arg4[%c0_113, %c0_114, %c5_115, %c32_116] {strides = array<i32: 1, 1, 1, 2>} : memref<1x16x16x64xf32, #tpu.memory_space<vmem>>, vector<1x16x1x16xf32>
    %117 = vector.shape_cast %116 : vector<1x16x1x16xf32> to vector<16x16xf32>
    %c0_117 = arith.constant 0 : index
    %c0_118 = arith.constant 0 : index
    %c5_119 = arith.constant 5 : index
    %c33_120 = arith.constant 33 : index
    %118 = tpu.strided_load %arg4[%c0_117, %c0_118, %c5_119, %c33_120] {strides = array<i32: 1, 1, 1, 2>} : memref<1x16x16x64xf32, #tpu.memory_space<vmem>>, vector<1x16x1x16xf32>
    %119 = vector.shape_cast %118 : vector<1x16x1x16xf32> to vector<16x16xf32>
    %120 = tpu.concatenate %113, %115, %117, %119 in 0 : vector<16x16xf32>, vector<16x16xf32>, vector<16x16xf32>, vector<16x16xf32> -> vector<64x16xf32>
    %121 = arith.truncf %120 : vector<64x16xf32> to vector<64x16xbf16>
    %cst_121 = arith.constant dense<0.000000e+00> : vector<16x16xf32>
    %122 = tpu.matmul %0, %121, %cst_121 {dimension_numbers = #tpu.dot_dimension_numbers<[1], [0], [0], [1], [0, 0, 1, 1], [], []>} : vector<16x64xbf16>, vector<64x16xbf16>, vector<16x16xf32> -> vector<16x16xf32>
    %123 = vector.broadcast %1 : vector<16x1xf32> to vector<16x16xf32>
    %124 = arith.addf %122, %123 : vector<16x16xf32>
    %125 = arith.negf %124 : vector<16x16xf32>
    %126 = math.exp %125 : vector<16x16xf32>
    %cst_122 = arith.constant 1.000000e+00 : f32
    %127 = vector.broadcast %cst_122 : f32 to vector<16x16xf32>
    %128 = arith.addf %127, %126 : vector<16x16xf32>
    %129 = arith.divf %127, %128 : vector<16x16xf32>
    %130 = arith.mulf %124, %129 : vector<16x16xf32>
    %c0_123 = arith.constant 0 : index
    %c0_124 = arith.constant 0 : index
    %c5_125 = arith.constant 5 : index
    %c0_126 = arith.constant 0 : index
    %131 = vector.load %arg5[%c0_123, %c0_124, %c5_125, %c0_126] : memref<1x16x16x16xf32, #tpu.memory_space<vmem>>, vector<1x16x1x16xf32>
    %132 = vector.shape_cast %131 : vector<1x16x1x16xf32> to vector<16x16xf32>
    %133 = vector.shape_cast %130 : vector<16x16xf32> to vector<1x16x1x16xf32>
    tpu.vector_store %arg5[%c0_123, %c0_124, %c5_125, %c0_126], %133 {strides = array<i32>} : memref<1x16x16x16xf32, #tpu.memory_space<vmem>>, vector<1x16x1x16xf32>,
    %c0_127 = arith.constant 0 : index
    %c0_128 = arith.constant 0 : index
    %c6 = arith.constant 6 : index
    %c0_129 = arith.constant 0 : index
    %134 = tpu.strided_load %arg4[%c0_127, %c0_128, %c6, %c0_129] {strides = array<i32: 1, 1, 1, 2>} : memref<1x16x16x64xf32, #tpu.memory_space<vmem>>, vector<1x16x1x16xf32>
    %135 = vector.shape_cast %134 : vector<1x16x1x16xf32> to vector<16x16xf32>
    %c0_130 = arith.constant 0 : index
    %c0_131 = arith.constant 0 : index
    %c6_132 = arith.constant 6 : index
    %c1_133 = arith.constant 1 : index
    %136 = tpu.strided_load %arg4[%c0_130, %c0_131, %c6_132, %c1_133] {strides = array<i32: 1, 1, 1, 2>} : memref<1x16x16x64xf32, #tpu.memory_space<vmem>>, vector<1x16x1x16xf32>
    %137 = vector.shape_cast %136 : vector<1x16x1x16xf32> to vector<16x16xf32>
    %c0_134 = arith.constant 0 : index
    %c0_135 = arith.constant 0 : index
    %c6_136 = arith.constant 6 : index
    %c32_137 = arith.constant 32 : index
    %138 = tpu.strided_load %arg4[%c0_134, %c0_135, %c6_136, %c32_137] {strides = array<i32: 1, 1, 1, 2>} : memref<1x16x16x64xf32, #tpu.memory_space<vmem>>, vector<1x16x1x16xf32>
    %139 = vector.shape_cast %138 : vector<1x16x1x16xf32> to vector<16x16xf32>
    %c0_138 = arith.constant 0 : index
    %c0_139 = arith.constant 0 : index
    %c6_140 = arith.constant 6 : index
    %c33_141 = arith.constant 33 : index
    %140 = tpu.strided_load %arg4[%c0_138, %c0_139, %c6_140, %c33_141] {strides = array<i32: 1, 1, 1, 2>} : memref<1x16x16x64xf32, #tpu.memory_space<vmem>>, vector<1x16x1x16xf32>
    %141 = vector.shape_cast %140 : vector<1x16x1x16xf32> to vector<16x16xf32>
    %142 = tpu.concatenate %135, %137, %139, %141 in 0 : vector<16x16xf32>, vector<16x16xf32>, vector<16x16xf32>, vector<16x16xf32> -> vector<64x16xf32>
    %143 = arith.truncf %142 : vector<64x16xf32> to vector<64x16xbf16>
    %cst_142 = arith.constant dense<0.000000e+00> : vector<16x16xf32>
    %144 = tpu.matmul %0, %143, %cst_142 {dimension_numbers = #tpu.dot_dimension_numbers<[1], [0], [0], [1], [0, 0, 1, 1], [], []>} : vector<16x64xbf16>, vector<64x16xbf16>, vector<16x16xf32> -> vector<16x16xf32>
    %145 = vector.broadcast %1 : vector<16x1xf32> to vector<16x16xf32>
    %146 = arith.addf %144, %145 : vector<16x16xf32>
    %147 = arith.negf %146 : vector<16x16xf32>
    %148 = math.exp %147 : vector<16x16xf32>
    %cst_143 = arith.constant 1.000000e+00 : f32
    %149 = vector.broadcast %cst_143 : f32 to vector<16x16xf32>
    %150 = arith.addf %149, %148 : vector<16x16xf32>
    %151 = arith.divf %149, %150 : vector<16x16xf32>
    %152 = arith.mulf %146, %151 : vector<16x16xf32>
    %c0_144 = arith.constant 0 : index
    %c0_145 = arith.constant 0 : index
    %c6_146 = arith.constant 6 : index
    %c0_147 = arith.constant 0 : index
    %153 = vector.load %arg5[%c0_144, %c0_145, %c6_146, %c0_147] : memref<1x16x16x16xf32, #tpu.memory_space<vmem>>, vector<1x16x1x16xf32>
    %154 = vector.shape_cast %153 : vector<1x16x1x16xf32> to vector<16x16xf32>
    %155 = vector.shape_cast %152 : vector<16x16xf32> to vector<1x16x1x16xf32>
    tpu.vector_store %arg5[%c0_144, %c0_145, %c6_146, %c0_147], %155 {strides = array<i32>} : memref<1x16x16x16xf32, #tpu.memory_space<vmem>>, vector<1x16x1x16xf32>,
    %c0_148 = arith.constant 0 : index
    %c0_149 = arith.constant 0 : index
    %c7 = arith.constant 7 : index
    %c0_150 = arith.constant 0 : index
    %156 = tpu.strided_load %arg4[%c0_148, %c0_149, %c7, %c0_150] {strides = array<i32: 1, 1, 1, 2>} : memref<1x16x16x64xf32, #tpu.memory_space<vmem>>, vector<1x16x1x16xf32>
    %157 = vector.shape_cast %156 : vector<1x16x1x16xf32> to vector<16x16xf32>
    %c0_151 = arith.constant 0 : index
    %c0_152 = arith.constant 0 : index
    %c7_153 = arith.constant 7 : index
    %c1_154 = arith.constant 1 : index
    %158 = tpu.strided_load %arg4[%c0_151, %c0_152, %c7_153, %c1_154] {strides = array<i32: 1, 1, 1, 2>} : memref<1x16x16x64xf32, #tpu.memory_space<vmem>>, vector<1x16x1x16xf32>
    %159 = vector.shape_cast %158 : vector<1x16x1x16xf32> to vector<16x16xf32>
    %c0_155 = arith.constant 0 : index
    %c0_156 = arith.constant 0 : index
    %c7_157 = arith.constant 7 : index
    %c32_158 = arith.constant 32 : index
    %160 = tpu.strided_load %arg4[%c0_155, %c0_156, %c7_157, %c32_158] {strides = array<i32: 1, 1, 1, 2>} : memref<1x16x16x64xf32, #tpu.memory_space<vmem>>, vector<1x16x1x16xf32>
    %161 = vector.shape_cast %160 : vector<1x16x1x16xf32> to vector<16x16xf32>
    %c0_159 = arith.constant 0 : index
    %c0_160 = arith.constant 0 : index
    %c7_161 = arith.constant 7 : index
    %c33_162 = arith.constant 33 : index
    %162 = tpu.strided_load %arg4[%c0_159, %c0_160, %c7_161, %c33_162] {strides = array<i32: 1, 1, 1, 2>} : memref<1x16x16x64xf32, #tpu.memory_space<vmem>>, vector<1x16x1x16xf32>
    %163 = vector.shape_cast %162 : vector<1x16x1x16xf32> to vector<16x16xf32>
    %164 = tpu.concatenate %157, %159, %161, %163 in 0 : vector<16x16xf32>, vector<16x16xf32>, vector<16x16xf32>, vector<16x16xf32> -> vector<64x16xf32>
    %165 = arith.truncf %164 : vector<64x16xf32> to vector<64x16xbf16>
    %cst_163 = arith.constant dense<0.000000e+00> : vector<16x16xf32>
    %166 = tpu.matmul %0, %165, %cst_163 {dimension_numbers = #tpu.dot_dimension_numbers<[1], [0], [0], [1], [0, 0, 1, 1], [], []>} : vector<16x64xbf16>, vector<64x16xbf16>, vector<16x16xf32> -> vector<16x16xf32>
    %167 = vector.broadcast %1 : vector<16x1xf32> to vector<16x16xf32>
    %168 = arith.addf %166, %167 : vector<16x16xf32>
    %169 = arith.negf %168 : vector<16x16xf32>
    %170 = math.exp %169 : vector<16x16xf32>
    %cst_164 = arith.constant 1.000000e+00 : f32
    %171 = vector.broadcast %cst_164 : f32 to vector<16x16xf32>
    %172 = arith.addf %171, %170 : vector<16x16xf32>
    %173 = arith.divf %171, %172 : vector<16x16xf32>
    %174 = arith.mulf %168, %173 : vector<16x16xf32>
    %c0_165 = arith.constant 0 : index
    %c0_166 = arith.constant 0 : index
    %c7_167 = arith.constant 7 : index
    %c0_168 = arith.constant 0 : index
    %175 = vector.load %arg5[%c0_165, %c0_166, %c7_167, %c0_168] : memref<1x16x16x16xf32, #tpu.memory_space<vmem>>, vector<1x16x1x16xf32>
    %176 = vector.shape_cast %175 : vector<1x16x1x16xf32> to vector<16x16xf32>
    %177 = vector.shape_cast %174 : vector<16x16xf32> to vector<1x16x1x16xf32>
    tpu.vector_store %arg5[%c0_165, %c0_166, %c7_167, %c0_168], %177 {strides = array<i32>} : memref<1x16x16x16xf32, #tpu.memory_space<vmem>>, vector<1x16x1x16xf32>,
    %c0_169 = arith.constant 0 : index
    %c0_170 = arith.constant 0 : index
    %c8 = arith.constant 8 : index
    %c0_171 = arith.constant 0 : index
    %178 = tpu.strided_load %arg4[%c0_169, %c0_170, %c8, %c0_171] {strides = array<i32: 1, 1, 1, 2>} : memref<1x16x16x64xf32, #tpu.memory_space<vmem>>, vector<1x16x1x16xf32>
    %179 = vector.shape_cast %178 : vector<1x16x1x16xf32> to vector<16x16xf32>
    %c0_172 = arith.constant 0 : index
    %c0_173 = arith.constant 0 : index
    %c8_174 = arith.constant 8 : index
    %c1_175 = arith.constant 1 : index
    %180 = tpu.strided_load %arg4[%c0_172, %c0_173, %c8_174, %c1_175] {strides = array<i32: 1, 1, 1, 2>} : memref<1x16x16x64xf32, #tpu.memory_space<vmem>>, vector<1x16x1x16xf32>
    %181 = vector.shape_cast %180 : vector<1x16x1x16xf32> to vector<16x16xf32>
    %c0_176 = arith.constant 0 : index
    %c0_177 = arith.constant 0 : index
    %c8_178 = arith.constant 8 : index
    %c32_179 = arith.constant 32 : index
    %182 = tpu.strided_load %arg4[%c0_176, %c0_177, %c8_178, %c32_179] {strides = array<i32: 1, 1, 1, 2>} : memref<1x16x16x64xf32, #tpu.memory_space<vmem>>, vector<1x16x1x16xf32>
    %183 = vector.shape_cast %182 : vector<1x16x1x16xf32> to vector<16x16xf32>
    %c0_180 = arith.constant 0 : index
    %c0_181 = arith.constant 0 : index
    %c8_182 = arith.constant 8 : index
    %c33_183 = arith.constant 33 : index
    %184 = tpu.strided_load %arg4[%c0_180, %c0_181, %c8_182, %c33_183] {strides = array<i32: 1, 1, 1, 2>} : memref<1x16x16x64xf32, #tpu.memory_space<vmem>>, vector<1x16x1x16xf32>
    %185 = vector.shape_cast %184 : vector<1x16x1x16xf32> to vector<16x16xf32>
    %186 = tpu.concatenate %179, %181, %183, %185 in 0 : vector<16x16xf32>, vector<16x16xf32>, vector<16x16xf32>, vector<16x16xf32> -> vector<64x16xf32>
    %187 = arith.truncf %186 : vector<64x16xf32> to vector<64x16xbf16>
    %cst_184 = arith.constant dense<0.000000e+00> : vector<16x16xf32>
    %188 = tpu.matmul %0, %187, %cst_184 {dimension_numbers = #tpu.dot_dimension_numbers<[1], [0], [0], [1], [0, 0, 1, 1], [], []>} : vector<16x64xbf16>, vector<64x16xbf16>, vector<16x16xf32> -> vector<16x16xf32>
    %189 = vector.broadcast %1 : vector<16x1xf32> to vector<16x16xf32>
    %190 = arith.addf %188, %189 : vector<16x16xf32>
    %191 = arith.negf %190 : vector<16x16xf32>
    %192 = math.exp %191 : vector<16x16xf32>
    %cst_185 = arith.constant 1.000000e+00 : f32
    %193 = vector.broadcast %cst_185 : f32 to vector<16x16xf32>
    %194 = arith.addf %193, %192 : vector<16x16xf32>
    %195 = arith.divf %193, %194 : vector<16x16xf32>
    %196 = arith.mulf %190, %195 : vector<16x16xf32>
    %c0_186 = arith.constant 0 : index
    %c0_187 = arith.constant 0 : index
    %c8_188 = arith.constant 8 : index
    %c0_189 = arith.constant 0 : index
    %197 = vector.load %arg5[%c0_186, %c0_187, %c8_188, %c0_189] : memref<1x16x16x16xf32, #tpu.memory_space<vmem>>, vector<1x16x1x16xf32>
    %198 = vector.shape_cast %197 : vector<1x16x1x16xf32> to vector<16x16xf32>
    %199 = vector.shape_cast %196 : vector<16x16xf32> to vector<1x16x1x16xf32>
    tpu.vector_store %arg5[%c0_186, %c0_187, %c8_188, %c0_189], %199 {strides = array<i32>} : memref<1x16x16x16xf32, #tpu.memory_space<vmem>>, vector<1x16x1x16xf32>,
    %c0_190 = arith.constant 0 : index
    %c0_191 = arith.constant 0 : index
    %c9 = arith.constant 9 : index
    %c0_192 = arith.constant 0 : index
    %200 = tpu.strided_load %arg4[%c0_190, %c0_191, %c9, %c0_192] {strides = array<i32: 1, 1, 1, 2>} : memref<1x16x16x64xf32, #tpu.memory_space<vmem>>, vector<1x16x1x16xf32>
    %201 = vector.shape_cast %200 : vector<1x16x1x16xf32> to vector<16x16xf32>
    %c0_193 = arith.constant 0 : index
    %c0_194 = arith.constant 0 : index
    %c9_195 = arith.constant 9 : index
    %c1_196 = arith.constant 1 : index
    %202 = tpu.strided_load %arg4[%c0_193, %c0_194, %c9_195, %c1_196] {strides = array<i32: 1, 1, 1, 2>} : memref<1x16x16x64xf32, #tpu.memory_space<vmem>>, vector<1x16x1x16xf32>
    %203 = vector.shape_cast %202 : vector<1x16x1x16xf32> to vector<16x16xf32>
    %c0_197 = arith.constant 0 : index
    %c0_198 = arith.constant 0 : index
    %c9_199 = arith.constant 9 : index
    %c32_200 = arith.constant 32 : index
    %204 = tpu.strided_load %arg4[%c0_197, %c0_198, %c9_199, %c32_200] {strides = array<i32: 1, 1, 1, 2>} : memref<1x16x16x64xf32, #tpu.memory_space<vmem>>, vector<1x16x1x16xf32>
    %205 = vector.shape_cast %204 : vector<1x16x1x16xf32> to vector<16x16xf32>
    %c0_201 = arith.constant 0 : index
    %c0_202 = arith.constant 0 : index
    %c9_203 = arith.constant 9 : index
    %c33_204 = arith.constant 33 : index
    %206 = tpu.strided_load %arg4[%c0_201, %c0_202, %c9_203, %c33_204] {strides = array<i32: 1, 1, 1, 2>} : memref<1x16x16x64xf32, #tpu.memory_space<vmem>>, vector<1x16x1x16xf32>
    %207 = vector.shape_cast %206 : vector<1x16x1x16xf32> to vector<16x16xf32>
    %208 = tpu.concatenate %201, %203, %205, %207 in 0 : vector<16x16xf32>, vector<16x16xf32>, vector<16x16xf32>, vector<16x16xf32> -> vector<64x16xf32>
    %209 = arith.truncf %208 : vector<64x16xf32> to vector<64x16xbf16>
    %cst_205 = arith.constant dense<0.000000e+00> : vector<16x16xf32>
    %210 = tpu.matmul %0, %209, %cst_205 {dimension_numbers = #tpu.dot_dimension_numbers<[1], [0], [0], [1], [0, 0, 1, 1], [], []>} : vector<16x64xbf16>, vector<64x16xbf16>, vector<16x16xf32> -> vector<16x16xf32>
    %211 = vector.broadcast %1 : vector<16x1xf32> to vector<16x16xf32>
    %212 = arith.addf %210, %211 : vector<16x16xf32>
    %213 = arith.negf %212 : vector<16x16xf32>
    %214 = math.exp %213 : vector<16x16xf32>
    %cst_206 = arith.constant 1.000000e+00 : f32
    %215 = vector.broadcast %cst_206 : f32 to vector<16x16xf32>
    %216 = arith.addf %215, %214 : vector<16x16xf32>
    %217 = arith.divf %215, %216 : vector<16x16xf32>
    %218 = arith.mulf %212, %217 : vector<16x16xf32>
    %c0_207 = arith.constant 0 : index
    %c0_208 = arith.constant 0 : index
    %c9_209 = arith.constant 9 : index
    %c0_210 = arith.constant 0 : index
    %219 = vector.load %arg5[%c0_207, %c0_208, %c9_209, %c0_210] : memref<1x16x16x16xf32, #tpu.memory_space<vmem>>, vector<1x16x1x16xf32>
    %220 = vector.shape_cast %219 : vector<1x16x1x16xf32> to vector<16x16xf32>
    %221 = vector.shape_cast %218 : vector<16x16xf32> to vector<1x16x1x16xf32>
    tpu.vector_store %arg5[%c0_207, %c0_208, %c9_209, %c0_210], %221 {strides = array<i32>} : memref<1x16x16x16xf32, #tpu.memory_space<vmem>>, vector<1x16x1x16xf32>,
    %c0_211 = arith.constant 0 : index
    %c0_212 = arith.constant 0 : index
    %c10 = arith.constant 10 : index
    %c0_213 = arith.constant 0 : index
    %222 = tpu.strided_load %arg4[%c0_211, %c0_212, %c10, %c0_213] {strides = array<i32: 1, 1, 1, 2>} : memref<1x16x16x64xf32, #tpu.memory_space<vmem>>, vector<1x16x1x16xf32>
    %223 = vector.shape_cast %222 : vector<1x16x1x16xf32> to vector<16x16xf32>
    %c0_214 = arith.constant 0 : index
    %c0_215 = arith.constant 0 : index
    %c10_216 = arith.constant 10 : index
    %c1_217 = arith.constant 1 : index
    %224 = tpu.strided_load %arg4[%c0_214, %c0_215, %c10_216, %c1_217] {strides = array<i32: 1, 1, 1, 2>} : memref<1x16x16x64xf32, #tpu.memory_space<vmem>>, vector<1x16x1x16xf32>
    %225 = vector.shape_cast %224 : vector<1x16x1x16xf32> to vector<16x16xf32>
    %c0_218 = arith.constant 0 : index
    %c0_219 = arith.constant 0 : index
    %c10_220 = arith.constant 10 : index
    %c32_221 = arith.constant 32 : index
    %226 = tpu.strided_load %arg4[%c0_218, %c0_219, %c10_220, %c32_221] {strides = array<i32: 1, 1, 1, 2>} : memref<1x16x16x64xf32, #tpu.memory_space<vmem>>, vector<1x16x1x16xf32>
    %227 = vector.shape_cast %226 : vector<1x16x1x16xf32> to vector<16x16xf32>
    %c0_222 = arith.constant 0 : index
    %c0_223 = arith.constant 0 : index
    %c10_224 = arith.constant 10 : index
    %c33_225 = arith.constant 33 : index
    %228 = tpu.strided_load %arg4[%c0_222, %c0_223, %c10_224, %c33_225] {strides = array<i32: 1, 1, 1, 2>} : memref<1x16x16x64xf32, #tpu.memory_space<vmem>>, vector<1x16x1x16xf32>
    %229 = vector.shape_cast %228 : vector<1x16x1x16xf32> to vector<16x16xf32>
    %230 = tpu.concatenate %223, %225, %227, %229 in 0 : vector<16x16xf32>, vector<16x16xf32>, vector<16x16xf32>, vector<16x16xf32> -> vector<64x16xf32>
    %231 = arith.truncf %230 : vector<64x16xf32> to vector<64x16xbf16>
    %cst_226 = arith.constant dense<0.000000e+00> : vector<16x16xf32>
    %232 = tpu.matmul %0, %231, %cst_226 {dimension_numbers = #tpu.dot_dimension_numbers<[1], [0], [0], [1], [0, 0, 1, 1], [], []>} : vector<16x64xbf16>, vector<64x16xbf16>, vector<16x16xf32> -> vector<16x16xf32>
    %233 = vector.broadcast %1 : vector<16x1xf32> to vector<16x16xf32>
    %234 = arith.addf %232, %233 : vector<16x16xf32>
    %235 = arith.negf %234 : vector<16x16xf32>
    %236 = math.exp %235 : vector<16x16xf32>
    %cst_227 = arith.constant 1.000000e+00 : f32
    %237 = vector.broadcast %cst_227 : f32 to vector<16x16xf32>
    %238 = arith.addf %237, %236 : vector<16x16xf32>
    %239 = arith.divf %237, %238 : vector<16x16xf32>
    %240 = arith.mulf %234, %239 : vector<16x16xf32>
    %c0_228 = arith.constant 0 : index
    %c0_229 = arith.constant 0 : index
    %c10_230 = arith.constant 10 : index
    %c0_231 = arith.constant 0 : index
    %241 = vector.load %arg5[%c0_228, %c0_229, %c10_230, %c0_231] : memref<1x16x16x16xf32, #tpu.memory_space<vmem>>, vector<1x16x1x16xf32>
    %242 = vector.shape_cast %241 : vector<1x16x1x16xf32> to vector<16x16xf32>
    %243 = vector.shape_cast %240 : vector<16x16xf32> to vector<1x16x1x16xf32>
    tpu.vector_store %arg5[%c0_228, %c0_229, %c10_230, %c0_231], %243 {strides = array<i32>} : memref<1x16x16x16xf32, #tpu.memory_space<vmem>>, vector<1x16x1x16xf32>,
    %c0_232 = arith.constant 0 : index
    %c0_233 = arith.constant 0 : index
    %c11 = arith.constant 11 : index
    %c0_234 = arith.constant 0 : index
    %244 = tpu.strided_load %arg4[%c0_232, %c0_233, %c11, %c0_234] {strides = array<i32: 1, 1, 1, 2>} : memref<1x16x16x64xf32, #tpu.memory_space<vmem>>, vector<1x16x1x16xf32>
    %245 = vector.shape_cast %244 : vector<1x16x1x16xf32> to vector<16x16xf32>
    %c0_235 = arith.constant 0 : index
    %c0_236 = arith.constant 0 : index
    %c11_237 = arith.constant 11 : index
    %c1_238 = arith.constant 1 : index
    %246 = tpu.strided_load %arg4[%c0_235, %c0_236, %c11_237, %c1_238] {strides = array<i32: 1, 1, 1, 2>} : memref<1x16x16x64xf32, #tpu.memory_space<vmem>>, vector<1x16x1x16xf32>
    %247 = vector.shape_cast %246 : vector<1x16x1x16xf32> to vector<16x16xf32>
    %c0_239 = arith.constant 0 : index
    %c0_240 = arith.constant 0 : index
    %c11_241 = arith.constant 11 : index
    %c32_242 = arith.constant 32 : index
    %248 = tpu.strided_load %arg4[%c0_239, %c0_240, %c11_241, %c32_242] {strides = array<i32: 1, 1, 1, 2>} : memref<1x16x16x64xf32, #tpu.memory_space<vmem>>, vector<1x16x1x16xf32>
    %249 = vector.shape_cast %248 : vector<1x16x1x16xf32> to vector<16x16xf32>
    %c0_243 = arith.constant 0 : index
    %c0_244 = arith.constant 0 : index
    %c11_245 = arith.constant 11 : index
    %c33_246 = arith.constant 33 : index
    %250 = tpu.strided_load %arg4[%c0_243, %c0_244, %c11_245, %c33_246] {strides = array<i32: 1, 1, 1, 2>} : memref<1x16x16x64xf32, #tpu.memory_space<vmem>>, vector<1x16x1x16xf32>
    %251 = vector.shape_cast %250 : vector<1x16x1x16xf32> to vector<16x16xf32>
    %252 = tpu.concatenate %245, %247, %249, %251 in 0 : vector<16x16xf32>, vector<16x16xf32>, vector<16x16xf32>, vector<16x16xf32> -> vector<64x16xf32>
    %253 = arith.truncf %252 : vector<64x16xf32> to vector<64x16xbf16>
    %cst_247 = arith.constant dense<0.000000e+00> : vector<16x16xf32>
    %254 = tpu.matmul %0, %253, %cst_247 {dimension_numbers = #tpu.dot_dimension_numbers<[1], [0], [0], [1], [0, 0, 1, 1], [], []>} : vector<16x64xbf16>, vector<64x16xbf16>, vector<16x16xf32> -> vector<16x16xf32>
    %255 = vector.broadcast %1 : vector<16x1xf32> to vector<16x16xf32>
    %256 = arith.addf %254, %255 : vector<16x16xf32>
    %257 = arith.negf %256 : vector<16x16xf32>
    %258 = math.exp %257 : vector<16x16xf32>
    %cst_248 = arith.constant 1.000000e+00 : f32
    %259 = vector.broadcast %cst_248 : f32 to vector<16x16xf32>
    %260 = arith.addf %259, %258 : vector<16x16xf32>
    %261 = arith.divf %259, %260 : vector<16x16xf32>
    %262 = arith.mulf %256, %261 : vector<16x16xf32>
    %c0_249 = arith.constant 0 : index
    %c0_250 = arith.constant 0 : index
    %c11_251 = arith.constant 11 : index
    %c0_252 = arith.constant 0 : index
    %263 = vector.load %arg5[%c0_249, %c0_250, %c11_251, %c0_252] : memref<1x16x16x16xf32, #tpu.memory_space<vmem>>, vector<1x16x1x16xf32>
    %264 = vector.shape_cast %263 : vector<1x16x1x16xf32> to vector<16x16xf32>
    %265 = vector.shape_cast %262 : vector<16x16xf32> to vector<1x16x1x16xf32>
    tpu.vector_store %arg5[%c0_249, %c0_250, %c11_251, %c0_252], %265 {strides = array<i32>} : memref<1x16x16x16xf32, #tpu.memory_space<vmem>>, vector<1x16x1x16xf32>,
    %c0_253 = arith.constant 0 : index
    %c0_254 = arith.constant 0 : index
    %c12 = arith.constant 12 : index
    %c0_255 = arith.constant 0 : index
    %266 = tpu.strided_load %arg4[%c0_253, %c0_254, %c12, %c0_255] {strides = array<i32: 1, 1, 1, 2>} : memref<1x16x16x64xf32, #tpu.memory_space<vmem>>, vector<1x16x1x16xf32>
    %267 = vector.shape_cast %266 : vector<1x16x1x16xf32> to vector<16x16xf32>
    %c0_256 = arith.constant 0 : index
    %c0_257 = arith.constant 0 : index
    %c12_258 = arith.constant 12 : index
    %c1_259 = arith.constant 1 : index
    %268 = tpu.strided_load %arg4[%c0_256, %c0_257, %c12_258, %c1_259] {strides = array<i32: 1, 1, 1, 2>} : memref<1x16x16x64xf32, #tpu.memory_space<vmem>>, vector<1x16x1x16xf32>
    %269 = vector.shape_cast %268 : vector<1x16x1x16xf32> to vector<16x16xf32>
    %c0_260 = arith.constant 0 : index
    %c0_261 = arith.constant 0 : index
    %c12_262 = arith.constant 12 : index
    %c32_263 = arith.constant 32 : index
    %270 = tpu.strided_load %arg4[%c0_260, %c0_261, %c12_262, %c32_263] {strides = array<i32: 1, 1, 1, 2>} : memref<1x16x16x64xf32, #tpu.memory_space<vmem>>, vector<1x16x1x16xf32>
    %271 = vector.shape_cast %270 : vector<1x16x1x16xf32> to vector<16x16xf32>
    %c0_264 = arith.constant 0 : index
    %c0_265 = arith.constant 0 : index
    %c12_266 = arith.constant 12 : index
    %c33_267 = arith.constant 33 : index
    %272 = tpu.strided_load %arg4[%c0_264, %c0_265, %c12_266, %c33_267] {strides = array<i32: 1, 1, 1, 2>} : memref<1x16x16x64xf32, #tpu.memory_space<vmem>>, vector<1x16x1x16xf32>
    %273 = vector.shape_cast %272 : vector<1x16x1x16xf32> to vector<16x16xf32>
    %274 = tpu.concatenate %267, %269, %271, %273 in 0 : vector<16x16xf32>, vector<16x16xf32>, vector<16x16xf32>, vector<16x16xf32> -> vector<64x16xf32>
    %275 = arith.truncf %274 : vector<64x16xf32> to vector<64x16xbf16>
    %cst_268 = arith.constant dense<0.000000e+00> : vector<16x16xf32>
    %276 = tpu.matmul %0, %275, %cst_268 {dimension_numbers = #tpu.dot_dimension_numbers<[1], [0], [0], [1], [0, 0, 1, 1], [], []>} : vector<16x64xbf16>, vector<64x16xbf16>, vector<16x16xf32> -> vector<16x16xf32>
    %277 = vector.broadcast %1 : vector<16x1xf32> to vector<16x16xf32>
    %278 = arith.addf %276, %277 : vector<16x16xf32>
    %279 = arith.negf %278 : vector<16x16xf32>
    %280 = math.exp %279 : vector<16x16xf32>
    %cst_269 = arith.constant 1.000000e+00 : f32
    %281 = vector.broadcast %cst_269 : f32 to vector<16x16xf32>
    %282 = arith.addf %281, %280 : vector<16x16xf32>
    %283 = arith.divf %281, %282 : vector<16x16xf32>
    %284 = arith.mulf %278, %283 : vector<16x16xf32>
    %c0_270 = arith.constant 0 : index
    %c0_271 = arith.constant 0 : index
    %c12_272 = arith.constant 12 : index
    %c0_273 = arith.constant 0 : index
    %285 = vector.load %arg5[%c0_270, %c0_271, %c12_272, %c0_273] : memref<1x16x16x16xf32, #tpu.memory_space<vmem>>, vector<1x16x1x16xf32>
    %286 = vector.shape_cast %285 : vector<1x16x1x16xf32> to vector<16x16xf32>
    %287 = vector.shape_cast %284 : vector<16x16xf32> to vector<1x16x1x16xf32>
    tpu.vector_store %arg5[%c0_270, %c0_271, %c12_272, %c0_273], %287 {strides = array<i32>} : memref<1x16x16x16xf32, #tpu.memory_space<vmem>>, vector<1x16x1x16xf32>,
    %c0_274 = arith.constant 0 : index
    %c0_275 = arith.constant 0 : index
    %c13 = arith.constant 13 : index
    %c0_276 = arith.constant 0 : index
    %288 = tpu.strided_load %arg4[%c0_274, %c0_275, %c13, %c0_276] {strides = array<i32: 1, 1, 1, 2>} : memref<1x16x16x64xf32, #tpu.memory_space<vmem>>, vector<1x16x1x16xf32>
    %289 = vector.shape_cast %288 : vector<1x16x1x16xf32> to vector<16x16xf32>
    %c0_277 = arith.constant 0 : index
    %c0_278 = arith.constant 0 : index
    %c13_279 = arith.constant 13 : index
    %c1_280 = arith.constant 1 : index
    %290 = tpu.strided_load %arg4[%c0_277, %c0_278, %c13_279, %c1_280] {strides = array<i32: 1, 1, 1, 2>} : memref<1x16x16x64xf32, #tpu.memory_space<vmem>>, vector<1x16x1x16xf32>
    %291 = vector.shape_cast %290 : vector<1x16x1x16xf32> to vector<16x16xf32>
    %c0_281 = arith.constant 0 : index
    %c0_282 = arith.constant 0 : index
    %c13_283 = arith.constant 13 : index
    %c32_284 = arith.constant 32 : index
    %292 = tpu.strided_load %arg4[%c0_281, %c0_282, %c13_283, %c32_284] {strides = array<i32: 1, 1, 1, 2>} : memref<1x16x16x64xf32, #tpu.memory_space<vmem>>, vector<1x16x1x16xf32>
    %293 = vector.shape_cast %292 : vector<1x16x1x16xf32> to vector<16x16xf32>
    %c0_285 = arith.constant 0 : index
    %c0_286 = arith.constant 0 : index
    %c13_287 = arith.constant 13 : index
    %c33_288 = arith.constant 33 : index
    %294 = tpu.strided_load %arg4[%c0_285, %c0_286, %c13_287, %c33_288] {strides = array<i32: 1, 1, 1, 2>} : memref<1x16x16x64xf32, #tpu.memory_space<vmem>>, vector<1x16x1x16xf32>
    %295 = vector.shape_cast %294 : vector<1x16x1x16xf32> to vector<16x16xf32>
    %296 = tpu.concatenate %289, %291, %293, %295 in 0 : vector<16x16xf32>, vector<16x16xf32>, vector<16x16xf32>, vector<16x16xf32> -> vector<64x16xf32>
    %297 = arith.truncf %296 : vector<64x16xf32> to vector<64x16xbf16>
    %cst_289 = arith.constant dense<0.000000e+00> : vector<16x16xf32>
    %298 = tpu.matmul %0, %297, %cst_289 {dimension_numbers = #tpu.dot_dimension_numbers<[1], [0], [0], [1], [0, 0, 1, 1], [], []>} : vector<16x64xbf16>, vector<64x16xbf16>, vector<16x16xf32> -> vector<16x16xf32>
    %299 = vector.broadcast %1 : vector<16x1xf32> to vector<16x16xf32>
    %300 = arith.addf %298, %299 : vector<16x16xf32>
    %301 = arith.negf %300 : vector<16x16xf32>
    %302 = math.exp %301 : vector<16x16xf32>
    %cst_290 = arith.constant 1.000000e+00 : f32
    %303 = vector.broadcast %cst_290 : f32 to vector<16x16xf32>
    %304 = arith.addf %303, %302 : vector<16x16xf32>
    %305 = arith.divf %303, %304 : vector<16x16xf32>
    %306 = arith.mulf %300, %305 : vector<16x16xf32>
    %c0_291 = arith.constant 0 : index
    %c0_292 = arith.constant 0 : index
    %c13_293 = arith.constant 13 : index
    %c0_294 = arith.constant 0 : index
    %307 = vector.load %arg5[%c0_291, %c0_292, %c13_293, %c0_294] : memref<1x16x16x16xf32, #tpu.memory_space<vmem>>, vector<1x16x1x16xf32>
    %308 = vector.shape_cast %307 : vector<1x16x1x16xf32> to vector<16x16xf32>
    %309 = vector.shape_cast %306 : vector<16x16xf32> to vector<1x16x1x16xf32>
    tpu.vector_store %arg5[%c0_291, %c0_292, %c13_293, %c0_294], %309 {strides = array<i32>} : memref<1x16x16x16xf32, #tpu.memory_space<vmem>>, vector<1x16x1x16xf32>,
    %c0_295 = arith.constant 0 : index
    %c0_296 = arith.constant 0 : index
    %c14 = arith.constant 14 : index
    %c0_297 = arith.constant 0 : index
    %310 = tpu.strided_load %arg4[%c0_295, %c0_296, %c14, %c0_297] {strides = array<i32: 1, 1, 1, 2>} : memref<1x16x16x64xf32, #tpu.memory_space<vmem>>, vector<1x16x1x16xf32>
    %311 = vector.shape_cast %310 : vector<1x16x1x16xf32> to vector<16x16xf32>
    %c0_298 = arith.constant 0 : index
    %c0_299 = arith.constant 0 : index
    %c14_300 = arith.constant 14 : index
    %c1_301 = arith.constant 1 : index
    %312 = tpu.strided_load %arg4[%c0_298, %c0_299, %c14_300, %c1_301] {strides = array<i32: 1, 1, 1, 2>} : memref<1x16x16x64xf32, #tpu.memory_space<vmem>>, vector<1x16x1x16xf32>
    %313 = vector.shape_cast %312 : vector<1x16x1x16xf32> to vector<16x16xf32>
    %c0_302 = arith.constant 0 : index
    %c0_303 = arith.constant 0 : index
    %c14_304 = arith.constant 14 : index
    %c32_305 = arith.constant 32 : index
    %314 = tpu.strided_load %arg4[%c0_302, %c0_303, %c14_304, %c32_305] {strides = array<i32: 1, 1, 1, 2>} : memref<1x16x16x64xf32, #tpu.memory_space<vmem>>, vector<1x16x1x16xf32>
    %315 = vector.shape_cast %314 : vector<1x16x1x16xf32> to vector<16x16xf32>
    %c0_306 = arith.constant 0 : index
    %c0_307 = arith.constant 0 : index
    %c14_308 = arith.constant 14 : index
    %c33_309 = arith.constant 33 : index
    %316 = tpu.strided_load %arg4[%c0_306, %c0_307, %c14_308, %c33_309] {strides = array<i32: 1, 1, 1, 2>} : memref<1x16x16x64xf32, #tpu.memory_space<vmem>>, vector<1x16x1x16xf32>
    %317 = vector.shape_cast %316 : vector<1x16x1x16xf32> to vector<16x16xf32>
    %318 = tpu.concatenate %311, %313, %315, %317 in 0 : vector<16x16xf32>, vector<16x16xf32>, vector<16x16xf32>, vector<16x16xf32> -> vector<64x16xf32>
    %319 = arith.truncf %318 : vector<64x16xf32> to vector<64x16xbf16>
    %cst_310 = arith.constant dense<0.000000e+00> : vector<16x16xf32>
    %320 = tpu.matmul %0, %319, %cst_310 {dimension_numbers = #tpu.dot_dimension_numbers<[1], [0], [0], [1], [0, 0, 1, 1], [], []>} : vector<16x64xbf16>, vector<64x16xbf16>, vector<16x16xf32> -> vector<16x16xf32>
    %321 = vector.broadcast %1 : vector<16x1xf32> to vector<16x16xf32>
    %322 = arith.addf %320, %321 : vector<16x16xf32>
    %323 = arith.negf %322 : vector<16x16xf32>
    %324 = math.exp %323 : vector<16x16xf32>
    %cst_311 = arith.constant 1.000000e+00 : f32
    %325 = vector.broadcast %cst_311 : f32 to vector<16x16xf32>
    %326 = arith.addf %325, %324 : vector<16x16xf32>
    %327 = arith.divf %325, %326 : vector<16x16xf32>
    %328 = arith.mulf %322, %327 : vector<16x16xf32>
    %c0_312 = arith.constant 0 : index
    %c0_313 = arith.constant 0 : index
    %c14_314 = arith.constant 14 : index
    %c0_315 = arith.constant 0 : index
    %329 = vector.load %arg5[%c0_312, %c0_313, %c14_314, %c0_315] : memref<1x16x16x16xf32, #tpu.memory_space<vmem>>, vector<1x16x1x16xf32>
    %330 = vector.shape_cast %329 : vector<1x16x1x16xf32> to vector<16x16xf32>
    %331 = vector.shape_cast %328 : vector<16x16xf32> to vector<1x16x1x16xf32>
    tpu.vector_store %arg5[%c0_312, %c0_313, %c14_314, %c0_315], %331 {strides = array<i32>} : memref<1x16x16x16xf32, #tpu.memory_space<vmem>>, vector<1x16x1x16xf32>,
    %c0_316 = arith.constant 0 : index
    %c0_317 = arith.constant 0 : index
    %c15 = arith.constant 15 : index
    %c0_318 = arith.constant 0 : index
    %332 = tpu.strided_load %arg4[%c0_316, %c0_317, %c15, %c0_318] {strides = array<i32: 1, 1, 1, 2>} : memref<1x16x16x64xf32, #tpu.memory_space<vmem>>, vector<1x16x1x16xf32>
    %333 = vector.shape_cast %332 : vector<1x16x1x16xf32> to vector<16x16xf32>
    %c0_319 = arith.constant 0 : index
    %c0_320 = arith.constant 0 : index
    %c15_321 = arith.constant 15 : index
    %c1_322 = arith.constant 1 : index
    %334 = tpu.strided_load %arg4[%c0_319, %c0_320, %c15_321, %c1_322] {strides = array<i32: 1, 1, 1, 2>} : memref<1x16x16x64xf32, #tpu.memory_space<vmem>>, vector<1x16x1x16xf32>
    %335 = vector.shape_cast %334 : vector<1x16x1x16xf32> to vector<16x16xf32>
    %c0_323 = arith.constant 0 : index
    %c0_324 = arith.constant 0 : index
    %c15_325 = arith.constant 15 : index
    %c32_326 = arith.constant 32 : index
    %336 = tpu.strided_load %arg4[%c0_323, %c0_324, %c15_325, %c32_326] {strides = array<i32: 1, 1, 1, 2>} : memref<1x16x16x64xf32, #tpu.memory_space<vmem>>, vector<1x16x1x16xf32>
    %337 = vector.shape_cast %336 : vector<1x16x1x16xf32> to vector<16x16xf32>
    %c0_327 = arith.constant 0 : index
    %c0_328 = arith.constant 0 : index
    %c15_329 = arith.constant 15 : index
    %c33_330 = arith.constant 33 : index
    %338 = tpu.strided_load %arg4[%c0_327, %c0_328, %c15_329, %c33_330] {strides = array<i32: 1, 1, 1, 2>} : memref<1x16x16x64xf32, #tpu.memory_space<vmem>>, vector<1x16x1x16xf32>
    %339 = vector.shape_cast %338 : vector<1x16x1x16xf32> to vector<16x16xf32>
    %340 = tpu.concatenate %333, %335, %337, %339 in 0 : vector<16x16xf32>, vector<16x16xf32>, vector<16x16xf32>, vector<16x16xf32> -> vector<64x16xf32>
    %341 = arith.truncf %340 : vector<64x16xf32> to vector<64x16xbf16>
    %cst_331 = arith.constant dense<0.000000e+00> : vector<16x16xf32>
    %342 = tpu.matmul %0, %341, %cst_331 {dimension_numbers = #tpu.dot_dimension_numbers<[1], [0], [0], [1], [0, 0, 1, 1], [], []>} : vector<16x64xbf16>, vector<64x16xbf16>, vector<16x16xf32> -> vector<16x16xf32>
    %343 = vector.broadcast %1 : vector<16x1xf32> to vector<16x16xf32>
    %344 = arith.addf %342, %343 : vector<16x16xf32>
    %345 = arith.negf %344 : vector<16x16xf32>
    %346 = math.exp %345 : vector<16x16xf32>
    %cst_332 = arith.constant 1.000000e+00 : f32
    %347 = vector.broadcast %cst_332 : f32 to vector<16x16xf32>
    %348 = arith.addf %347, %346 : vector<16x16xf32>
    %349 = arith.divf %347, %348 : vector<16x16xf32>
    %350 = arith.mulf %344, %349 : vector<16x16xf32>
    %c0_333 = arith.constant 0 : index
    %c0_334 = arith.constant 0 : index
    %c15_335 = arith.constant 15 : index
    %c0_336 = arith.constant 0 : index
    %351 = vector.load %arg5[%c0_333, %c0_334, %c15_335, %c0_336] : memref<1x16x16x16xf32, #tpu.memory_space<vmem>>, vector<1x16x1x16xf32>
    %352 = vector.shape_cast %351 : vector<1x16x1x16xf32> to vector<16x16xf32>
    %353 = vector.shape_cast %350 : vector<16x16xf32> to vector<1x16x1x16xf32>
    tpu.vector_store %arg5[%c0_333, %c0_334, %c15_335, %c0_336], %353 {strides = array<i32>} : memref<1x16x16x16xf32, #tpu.memory_space<vmem>>, vector<1x16x1x16xf32>,
    return
  }
  func.func @transform_0(%arg0: i32, %arg1: i32) -> (i32, i32) {
    %c0_i32 = arith.constant 0 : i32
    %c0_i32_0 = arith.constant 0 : i32
    %c0_i32_1 = arith.constant 0 : i32
    return %c0_i32, %c0_i32_0 : i32, i32
  }
  func.func @transform_1(%arg0: i32, %arg1: i32) -> (i32, i32) {
    %c0_i32 = arith.constant 0 : i32
    %c0_i32_0 = arith.constant 0 : i32
    %c0_i32_1 = arith.constant 0 : i32
    return %c0_i32, %c0_i32_0 : i32, i32
  }
  func.func @transform_2(%arg0: i32, %arg1: i32) -> (i32, i32, i32, i32) {
    %c0_i32 = arith.constant 0 : i32
    %c0_i32_0 = arith.constant 0 : i32
    %c0_i32_1 = arith.constant 0 : i32
    return %arg0, %c0_i32, %arg1, %c0_i32_0 : i32, i32, i32, i32
  }
  func.func @transform_3(%arg0: i32, %arg1: i32) -> (i32, i32, i32, i32) {
    %c0_i32 = arith.constant 0 : i32
    %c0_i32_0 = arith.constant 0 : i32
    %c0_i32_1 = arith.constant 0 : i32
    return %arg0, %c0_i32, %arg1, %c0_i32_0 : i32, i32, i32, i32
  }
}

module attributes {stable_mosaic.version = 11 : i64} {
  func.func @_matmul_silu_kernel(%arg0: i32, %arg1: i32, %arg2: memref<16x64xbf16, #tpu.memory_space<vmem>>, %arg3: memref<16x1xf32, #tpu.memory_space<vmem>>, %arg4: memref<1x64x128xbf16, #tpu.memory_space<vmem>>, %arg5: memref<1x16x128xf32, #tpu.memory_space<vmem>>) attributes {dimension_semantics = [#tpu.dimension_semantics<parallel>, #tpu.dimension_semantics<parallel>], iteration_bounds = array<i64: 2, 2>, scalar_prefetch = 0 : i64, scratch_operands = 0 : i64, tpu.core_type = #tpu.core_type<tc>, window_params = [{pipeline_mode = #tpu.pipeline_mode<synchronous>, transform_indices = @transform_0, window_bounds = array<i64: 16, 64>}, {pipeline_mode = #tpu.pipeline_mode<synchronous>, transform_indices = @transform_1, window_bounds = array<i64: 16, 1>}, {transform_indices = @transform_2, window_bounds = array<i64: 1, 64, 128>}, {transform_indices = @transform_3, window_bounds = array<i64: 1, 16, 128>}]} {
    %c0 = arith.constant 0 : index
    %c0_0 = arith.constant 0 : index
    %0 = vector.load %arg2[%c0, %c0_0] : memref<16x64xbf16, #tpu.memory_space<vmem>>, vector<16x64xbf16>
    %c0_1 = arith.constant 0 : index
    %c0_2 = arith.constant 0 : index
    %c0_3 = arith.constant 0 : index
    %1 = vector.load %arg4[%c0_1, %c0_2, %c0_3] : memref<1x64x128xbf16, #tpu.memory_space<vmem>>, vector<1x64x128xbf16>
    %2 = vector.shape_cast %1 : vector<1x64x128xbf16> to vector<64x128xbf16>
    %cst = arith.constant dense<0.000000e+00> : vector<16x128xf32>
    %3 = tpu.matmul %0, %2, %cst {dimension_numbers = #tpu.dot_dimension_numbers<[1], [0], [0], [1], [0, 0, 1, 1], [], []>} : vector<16x64xbf16>, vector<64x128xbf16>, vector<16x128xf32> -> vector<16x128xf32>
    %c0_4 = arith.constant 0 : index
    %c0_5 = arith.constant 0 : index
    %4 = vector.load %arg3[%c0_4, %c0_5] : memref<16x1xf32, #tpu.memory_space<vmem>>, vector<16x1xf32>
    %5 = vector.broadcast %4 : vector<16x1xf32> to vector<16x128xf32>
    %6 = arith.addf %3, %5 : vector<16x128xf32>
    %7 = arith.negf %6 : vector<16x128xf32>
    %8 = math.exp %7 : vector<16x128xf32>
    %cst_6 = arith.constant 1.000000e+00 : f32
    %9 = vector.broadcast %cst_6 : f32 to vector<16x128xf32>
    %10 = arith.addf %9, %8 : vector<16x128xf32>
    %11 = arith.divf %9, %10 : vector<16x128xf32>
    %12 = arith.mulf %6, %11 : vector<16x128xf32>
    %c0_7 = arith.constant 0 : index
    %c0_8 = arith.constant 0 : index
    %c0_9 = arith.constant 0 : index
    %13 = vector.load %arg5[%c0_7, %c0_8, %c0_9] : memref<1x16x128xf32, #tpu.memory_space<vmem>>, vector<1x16x128xf32>
    %14 = vector.shape_cast %13 : vector<1x16x128xf32> to vector<16x128xf32>
    %15 = vector.shape_cast %12 : vector<16x128xf32> to vector<1x16x128xf32>
    tpu.vector_store %arg5[%c0_7, %c0_8, %c0_9], %15 {strides = array<i32>} : memref<1x16x128xf32, #tpu.memory_space<vmem>>, vector<1x16x128xf32>,
    return
  }
  func.func @transform_0(%arg0: i32, %arg1: i32) -> (i32, i32) {
    %c0_i32 = arith.constant 0 : i32
    %c0_i32_0 = arith.constant 0 : i32
    %c0_i32_1 = arith.constant 0 : i32
    return %c0_i32, %c0_i32_0 : i32, i32
  }
  func.func @transform_1(%arg0: i32, %arg1: i32) -> (i32, i32) {
    %c0_i32 = arith.constant 0 : i32
    %c0_i32_0 = arith.constant 0 : i32
    %c0_i32_1 = arith.constant 0 : i32
    return %c0_i32, %c0_i32_0 : i32, i32
  }
  func.func @transform_2(%arg0: i32, %arg1: i32) -> (i32, i32, i32) {
    %c0_i32 = arith.constant 0 : i32
    %c0_i32_0 = arith.constant 0 : i32
    return %arg0, %c0_i32, %arg1 : i32, i32, i32
  }
  func.func @transform_3(%arg0: i32, %arg1: i32) -> (i32, i32, i32) {
    %c0_i32 = arith.constant 0 : i32
    %c0_i32_0 = arith.constant 0 : i32
    return %arg0, %c0_i32, %arg1 : i32, i32, i32
  }
}

</mosaic_0001>

<llo_original>
// kernel: _conv_silu_two_pass.1
$region0: #{_conv_silu_two_pass.1}
  #allocation0 [shape = 'u32[]', space=smem, size = 0x4, offset = 0x4, fixed_abs, tag = 'smem constant byte address 0x4 - core index']
  #allocation1 [shape = 'u32[144,128]{1,0:T(1,128)}', space=vmem, size = 0x12000, scoped, tag = 'internal scratch']
  %s0 = inlined_call_operand.vmem [shape: bf16[16,64], index: 0, kind: input, shape index: {}]
  %s1 = inlined_call_operand.vmem [shape: f32[16,1], index: 1, kind: input, shape index: {}]
  %s2 = inlined_call_operand.vmem [shape: bf16[2,64,256], index: 2, kind: input, shape index: {}]
  %s3 = inlined_call_operand.vmem [shape: f32[2,16,256], index: 3, kind: output, shape index: {}]
  %s4 = sld [smem:[#allocation0]]
  $region120: #{_conv_silu_two_pass.1} parent=0
    _
  %s6 = ssub.s32 1, %s4
  %s7 = scalar_select 0, %s6, %s4
  $region1: #{_conv_silu_two_pass.1} parent=0
    #allocation2 [shape = 'u8[32768]{0}', space=vmem, size = 0x8000, scoped, tag = 'input window, operand 2']
    #allocation3 [shape = 'u8[16384]{0}', space=vmem, size = 0x4000, scoped, tag = 'output window, operand 0']
    loop: start=0, step=1, limit=6
    $region2: #{_conv_silu_two_pass.1} parent=1 // loop_pre_header
      _
    $region3: #{_conv_silu_two_pass.1} parent=1 // loop_header
      %s9 = sphi 0, %s13
      %p10 = scmp.ge.s32.totalorder %s9, 6
      %s16 = sphi 0, %s28
      %s17 = sphi 0, %s24
      %s18 = sphi 0, %s16
      %s19 = sphi 0, %s17
      %s20 = sphi 0, %s18
      %s21 = sphi 0, %s19
      %s29 = sphi 0, %s29
      %s31 = sphi 0, %s29
      %s32 = sphi 0, %s31
      %s46 = sphi 0, %s32
      %s50 = sphi 0, %s50
      %s52 = sphi 0, %s50
      %s53 = sphi 0, %s52
      %s67 = sphi 0, %s53
      %s75 = sphi 0, %s77
      %s78 = sphi 0, %s75
      %s79 = sphi 0, %s78
      %s95 = sphi 0, %s79
      %s103 = sphi 0, %s105
      %s106 = sphi 0, %s103
      %s107 = sphi 0, %s106
      %s123 = sphi 0, %s107
    $region4: #{_conv_silu_two_pass.1} parent=1 // loop_header_branch
      %12 = sbr.rel (%p10) target = $region8
    $region5: #{_conv_silu_two_pass.1} parent=1 // loop_body
      %s14 = ssub.s32 %s9, 1
      %s15 = ssub.s32 %s9, 2
      %s22 = sadd.s32 1, %s17
      %p23 = scmp.ge.s32.totalorder %s22, 2
      %s24 = scalar_select %p23, 0, %s22
      %s25 = sadd.s32 1, %s16
      %s26 = scalar_select %p23, %s25, %s16
      %p27 = scmp.ge.s32.totalorder %s26, 2
      %s28 = scalar_select %p27, 0, %s26
      %s30 = sadd.s32 %s29, 1
      %p33 = scmp.eq.s32.totalorder %s9, 3
      %p34 = scmp.ne.s32.totalorder %s29, %s31
      %p35 = scmp.eq.s32.totalorder %s9, 0
      %p36 = por %p34, %p35
      %p37 = scmp.ne.s32.totalorder %s29, %s31
      %p38 = scmp.eq.s32.totalorder %s14, 3
      %p39 = por %p37, %p38
      %p40 = scmp.ne.s32.totalorder %s31, %s32
      %p41 = scmp.eq.s32.totalorder %s14, 0
      %p42 = por %p40, %p41
      %p43 = scmp.ne.s32.totalorder %s31, %s32
      %p44 = scmp.eq.s32.totalorder %s15, 3
      %p45 = por %p43, %p44
      %p47 = scmp.ne.s32.totalorder %s32, %s46
      %p48 = scmp.eq.s32.totalorder %s15, 0
      %p49 = por %p47, %p48
      %s51 = sadd.s32 %s50, 1
      %p54 = scmp.eq.s32.totalorder %s9, 3
      %p55 = scmp.ne.s32.totalorder %s50, %s52
      %p56 = scmp.eq.s32.totalorder %s9, 0
      %p57 = por %p55, %p56
      %p58 = scmp.ne.s32.totalorder %s50, %s52
      %p59 = scmp.eq.s32.totalorder %s14, 3
      %p60 = por %p58, %p59
      %p61 = scmp.ne.s32.totalorder %s52, %s53
      %p62 = scmp.eq.s32.totalorder %s14, 0
      %p63 = por %p61, %p62
      %p64 = scmp.ne.s32.totalorder %s52, %s53
      %p65 = scmp.eq.s32.totalorder %s15, 3
      %p66 = por %p64, %p65
      %p68 = scmp.ne.s32.totalorder %s53, %s67
      %p69 = scmp.eq.s32.totalorder %s15, 0
      %p70 = por %p68, %p69
      %s71 = ssub.s32 %s16, %s28
      %s72 = ssub.s32 %s17, %s24
      %s73 = sor.u32 %s71, %s72
      %p74 = scmp.eq.s32.totalorder %s73, 0
      %s76 = sadd.s32 %s75, 1
      %s77 = scalar_select %p74, %s75, %s76
      %p80 = pneg %p74
      %p81 = scmp.eq.s32.totalorder %s9, 3
      %p82 = por %p80, %p81
      %p83 = scmp.ne.s32.totalorder %s75, %s78
      %p84 = scmp.eq.s32.totalorder %s9, 0
      %p85 = por %p83, %p84
      %p86 = scmp.ne.s32.totalorder %s75, %s78
      %p87 = scmp.eq.s32.totalorder %s14, 3
      %p88 = por %p86, %p87
      %p89 = scmp.ne.s32.totalorder %s78, %s79
      %p90 = scmp.eq.s32.totalorder %s14, 0
      %p91 = por %p89, %p90
      %p92 = scmp.ne.s32.totalorder %s78, %s79
      %p93 = scmp.eq.s32.totalorder %s15, 3
      %p94 = por %p92, %p93
      %p96 = scmp.ne.s32.totalorder %s79, %s95
      %p97 = scmp.eq.s32.totalorder %s15, 0
      %p98 = por %p96, %p97
      %s99 = ssub.s32 %s16, %s28
      %s100 = ssub.s32 %s17, %s24
      %s101 = sor.u32 %s99, %s100
      %p102 = scmp.eq.s32.totalorder %s101, 0
      %s104 = sadd.s32 %s103, 1
      %s105 = scalar_select %p102, %s103, %s104
      %p108 = pneg %p102
      %p109 = scmp.eq.s32.totalorder %s9, 3
      %p110 = por %p108, %p109
      %p111 = scmp.ne.s32.totalorder %s103, %s106
      %p112 = scmp.eq.s32.totalorder %s9, 0
      %p113 = por %p111, %p112
      %p114 = scmp.ne.s32.totalorder %s103, %s106
      %p115 = scmp.eq.s32.totalorder %s14, 3
      %p116 = por %p114, %p115
      %p117 = scmp.ne.s32.totalorder %s106, %s107
      %p118 = scmp.eq.s32.totalorder %s14, 0
      %p119 = por %p117, %p118
      %p120 = scmp.ne.s32.totalorder %s106, %s107
      %p121 = scmp.eq.s32.totalorder %s15, 3
      %p122 = por %p120, %p121
      %p124 = scmp.ne.s32.totalorder %s107, %s123
      %p125 = scmp.eq.s32.totalorder %s15, 0
      %p126 = por %p124, %p125
      %p127 = scmp.le.s32.totalorder 1, %s9
      %p128 = scmp.lt.s32.totalorder %s9, 5
      %p129 = pnand %p127, %p128
      %p130 = pneg %p129
      // Predicated region
      $region9: #{_conv_silu_two_pass.1} parent=5 // pred_check
        _
      $region10: #{_conv_silu_two_pass.1} parent=5 // pred_check_branch
        %132 = sbr.rel (%p129) target = $region12
      $region11: #{_conv_silu_two_pass.1} parent=5 // pred_region
        %s133 = ssub.s32 %s9, 1
        // Predicated region
        $region13: #{_conv_silu_two_pass.1} parent=11 // pred_check
          %p134 = pneg %p42
        $region14: #{_conv_silu_two_pass.1} parent=11 // pred_check_branch
          %136 = sbr.rel (%p134) target = $region16
        $region15: #{_conv_silu_two_pass.1} parent=11 // pred_region
          _
        $region16: #{_conv_silu_two_pass.1} parent=11 // pred_fallthru
          _
        // Predicated region
        $region17: #{_conv_silu_two_pass.1} parent=11 // pred_check
          %p137 = pneg %p63
        $region18: #{_conv_silu_two_pass.1} parent=11 // pred_check_branch
          %139 = sbr.rel (%p137) target = $region20
        $region19: #{_conv_silu_two_pass.1} parent=11 // pred_region
          _
        $region20: #{_conv_silu_two_pass.1} parent=11 // pred_fallthru
          _
      $region12: #{_conv_silu_two_pass.1} parent=5 // pred_fallthru
        _
      %p140 = scmp.lt.s32.totalorder %s9, 4
      // Predicated region
      $region21: #{_conv_silu_two_pass.1} parent=5 // pred_check
        %p141 = pneg %p140
      $region22: #{_conv_silu_two_pass.1} parent=5 // pred_check_branch
        %143 = sbr.rel (%p141) target = $region24
      $region23: #{_conv_silu_two_pass.1} parent=5 // pred_region
        // Predicated region
        $region25: #{_conv_silu_two_pass.1} parent=23 // pred_check
          %p144 = pneg %p85
        $region26: #{_conv_silu_two_pass.1} parent=23 // pred_check_branch
          %146 = sbr.rel (%p144) target = $region28
        $region27: #{_conv_silu_two_pass.1} parent=23 // pred_region
          %s147 = sand.u32 %s75, 1
          %s148 = sand.u32 %s75, 1
          %s149 = smul.addr %s148, 32
          %s150 = scalar_lea.vmem [#allocation2], %s149
          %s151 = smul.addr %s16, 16
          %s152 = sadd.s32 %s17, %s151
          %s153 = smul.addr %s152, 4
          %s154 = scalar_lea.vmem %s2, %s153
          // Predicated region
          $region29: #{_conv_silu_two_pass.1} parent=27 // pred_check
            _
          $region30: #{_conv_silu_two_pass.1} parent=27 // pred_check_branch
            %156 = sbr.rel (0) target = $region32
          $region31: #{_conv_silu_two_pass.1} parent=27 // pred_region
            // Predicated region
            $region33: #{_conv_silu_two_pass.1} parent=31 // pred_check
              _
            $region34: #{_conv_silu_two_pass.1} parent=31 // pred_check_branch
              %158 = sbr.rel target = $region36
            $region35: #{_conv_silu_two_pass.1} parent=31 // pred_region
              // Predicated region
              $region48: #{_conv_silu_two_pass.1} parent=35 // pred_check
                _
              $region49: #{_conv_silu_two_pass.1} parent=35 // pred_check_branch
                %187 = sbr.rel (0) target = $region51
              $region50: #{_conv_silu_two_pass.1} parent=35 // pred_region
                loop: start=0, step=1, limit=1
                $region52: #{_conv_silu_two_pass.1} parent=50 // loop_pre_header
                  _
                $region53: #{_conv_silu_two_pass.1} parent=50 // loop_header
                  %s189 = sphi 0, %s193
                  %p190 = scmp.ge.s32.totalorder %s189, 1
                  %s194 = sphi %s154, %s154
                  %s195 = sphi %s150, %s150
                $region54: #{_conv_silu_two_pass.1} parent=50 // loop_header_branch
                  %192 = sbr.rel (%p190) target = $region58
                $region55: #{_conv_silu_two_pass.1} parent=50 // loop_body
                  _
                $region56: #{_conv_silu_two_pass.1} parent=50 // loop_footer
                  %s193 = sadd.s32 1, %s189
                $region57: #{_conv_silu_two_pass.1} parent=50 // loop_footer_branch
                  %188 = sbr.rel target = $region53
                $region58: #{_conv_silu_two_pass.1} parent=50 // loop_exit
                  _
                loop: start=0, step=1, limit=1
                $region59: #{_conv_silu_two_pass.1} parent=50 // loop_pre_header
                  _
                $region60: #{_conv_silu_two_pass.1} parent=50 // loop_header
                  %s198 = sphi 0, %s202
                  %p199 = scmp.ge.s32.totalorder %s198, 1
                  %s203 = sphi %s154, %s154
                  %s204 = sphi %s150, %s150
                $region61: #{_conv_silu_two_pass.1} parent=50 // loop_header_branch
                  %201 = sbr.rel (%p199) target = $region65
                $region62: #{_conv_silu_two_pass.1} parent=50 // loop_body
                  %v205 = vld [vmem:[%s203] sm:$0xf]
                  %206 = vst [vmem:[%s204] sm:$0xf] %v205
                  %v207 = vld [vmem:[%s203 + $0x8] sm:$0xf]
                  %208 = vst [vmem:[%s204 + $0x4] sm:$0xf] %v207
                  %v209 = vld [vmem:[%s203 + $0x10] sm:$0xf]
                  %210 = vst [vmem:[%s204 + $0x8] sm:$0xf] %v209
                  %v211 = vld [vmem:[%s203 + $0x18] sm:$0xf]
                  %212 = vst [vmem:[%s204 + $0xc] sm:$0xf] %v211
                  %v213 = vld [vmem:[%s203 + $0x20] sm:$0xf]
                  %214 = vst [vmem:[%s204 + $0x10] sm:$0xf] %v213
                  %v215 = vld [vmem:[%s203 + $0x28] sm:$0xf]
                  %216 = vst [vmem:[%s204 + $0x14] sm:$0xf] %v215
                  %v217 = vld [vmem:[%s203 + $0x30] sm:$0xf]
                  %218 = vst [vmem:[%s204 + $0x18] sm:$0xf] %v217
                  %v219 = vld [vmem:[%s203 + $0x38] sm:$0xf]
                  %220 = vst [vmem:[%s204 + $0x1c] sm:$0xf] %v219
                $region63: #{_conv_silu_two_pass.1} parent=50 // loop_footer
                  %s202 = sadd.s32 1, %s198
                $region64: #{_conv_silu_two_pass.1} parent=50 // loop_footer_branch
                  %197 = sbr.rel target = $region60
                $region65: #{_conv_silu_two_pass.1} parent=50 // loop_exit
                  _
              $region51: #{_conv_silu_two_pass.1} parent=35 // pred_fallthru
                _
            $region36: #{_conv_silu_two_pass.1} parent=31 // pred_fallthru
              _
            // Predicated region
            $region37: #{_conv_silu_two_pass.1} parent=31 // pred_check
              _
            $region38: #{_conv_silu_two_pass.1} parent=31 // pred_check_branch
              %160 = sbr.rel (0) target = $region40
            $region39: #{_conv_silu_two_pass.1} parent=31 // pred_region
              loop: start=0, step=1, limit=1
              $region41: #{_conv_silu_two_pass.1} parent=39 // loop_pre_header
                _
              $region42: #{_conv_silu_two_pass.1} parent=39 // loop_header
                %s163 = sphi 0, %s167
                %p164 = scmp.ge.s32.totalorder %s163, 1
                %s168 = sphi %s154, %s154
                %s169 = sphi %s150, %s150
              $region43: #{_conv_silu_two_pass.1} parent=39 // loop_header_branch
                %166 = sbr.rel (%p164) target = $region47
              $region44: #{_conv_silu_two_pass.1} parent=39 // loop_body
                %v170 = vld [vmem:[%s168] sm:$0xf]
                %171 = vst [vmem:[%s169] sm:$0xf] %v170
                %v172 = vld [vmem:[%s168 + $0x8] sm:$0xf]
                %173 = vst [vmem:[%s169 + $0x4] sm:$0xf] %v172
                %v174 = vld [vmem:[%s168 + $0x10] sm:$0xf]
                %175 = vst [vmem:[%s169 + $0x8] sm:$0xf] %v174
                %v176 = vld [vmem:[%s168 + $0x18] sm:$0xf]
                %177 = vst [vmem:[%s169 + $0xc] sm:$0xf] %v176
                %v178 = vld [vmem:[%s168 + $0x20] sm:$0xf]
                %179 = vst [vmem:[%s169 + $0x10] sm:$0xf] %v178
                %v180 = vld [vmem:[%s168 + $0x28] sm:$0xf]
                %181 = vst [vmem:[%s169 + $0x14] sm:$0xf] %v180
                %v182 = vld [vmem:[%s168 + $0x30] sm:$0xf]
                %183 = vst [vmem:[%s169 + $0x18] sm:$0xf] %v182
                %v184 = vld [vmem:[%s168 + $0x38] sm:$0xf]
                %185 = vst [vmem:[%s169 + $0x1c] sm:$0xf] %v184
              $region45: #{_conv_silu_two_pass.1} parent=39 // loop_footer
                %s167 = sadd.s32 1, %s163
              $region46: #{_conv_silu_two_pass.1} parent=39 // loop_footer_branch
                %162 = sbr.rel target = $region42
              $region47: #{_conv_silu_two_pass.1} parent=39 // loop_exit
                _
            $region40: #{_conv_silu_two_pass.1} parent=31 // pred_fallthru
              _
          $region32: #{_conv_silu_two_pass.1} parent=27 // pred_fallthru
            _
          %221 = vnop
        $region28: #{_conv_silu_two_pass.1} parent=23 // pred_fallthru
          _
      $region24: #{_conv_silu_two_pass.1} parent=5 // pred_fallthru
        _
      %p222 = scmp.le.s32.totalorder 1, %s9
      %p223 = scmp.lt.s32.totalorder %s9, 5
      %p224 = pnand %p222, %p223
      %p225 = pneg %p224
      // Predicated region
      $region66: #{_conv_silu_two_pass.1} parent=5 // pred_check
        _
      $region67: #{_conv_silu_two_pass.1} parent=5 // pred_check_branch
        %227 = sbr.rel (%p224) target = $region69
      $region68: #{_conv_silu_two_pass.1} parent=5 // pred_region
        %s228 = ssub.s32 %s9, 1
        %s229 = sand.u32 %s78, 1
        %s230 = sand.u32 %s78, 1
        %s231 = smul.addr %s230, 32
        %s232 = scalar_lea.vmem [#allocation2], %s231
        // Predicated region
        $region70: #{_conv_silu_two_pass.1} parent=68 // pred_check
          %p233 = pneg %p91
        $region71: #{_conv_silu_two_pass.1} parent=68 // pred_check_branch
          %235 = sbr.rel (%p233) target = $region73
        $region72: #{_conv_silu_two_pass.1} parent=68 // pred_region
          _
        $region73: #{_conv_silu_two_pass.1} parent=68 // pred_fallthru
          _
        %p236 = pneg %p42
        %p237 = pneg %p39
        %p238 = pneg %p63
        %p239 = pneg %p60
        %s240 = sand.u32 %s78, 1
        %s241 = sand.u32 %s78, 1
        %s242 = smul.addr %s241, 32
        %s243 = scalar_lea.vmem [#allocation2], %s242
        %p244 = pneg %p91
        %p245 = pneg %p88
        %p246 = pneg %p119
        %p247 = pneg %p116
        %s248 = sand.u32 %s106, 1
        %s249 = sand.u32 %s106, 1
        %s250 = smul.addr %s249, 16
        %s251 = scalar_lea.vmem [#allocation3], %s250
        %v253 = vld [vmem:[%s0] sm:$0xf]
        %v254 = vld [vmem:[%s0 + $0x4] sm:$0xf]
        %v255 = vld [vmem:[%s232] sm:$0xf]
        %v256 = vld [vmem:[%s232 + $0x4] sm:$0xf]
        %v257 = vld [vmem:[%s232 + $0x8] sm:$0xf]
        %v258 = vld [vmem:[%s232 + $0xc] sm:$0xf]
        %v259 = vld [vmem:[%s232 + $0x10] sm:$0xf]
        %v260 = vld [vmem:[%s232 + $0x14] sm:$0xf]
        %v261 = vld [vmem:[%s232 + $0x18] sm:$0xf]
        %v262 = vld [vmem:[%s232 + $0x1c] sm:$0xf]
        %v263 = vld [vmem:[%s1] sm:$0xff]
        %v264 = vld [vmem:[%s1 + $0x8] sm:$0xff]
        %266 = vset.pattern.permute.xlu0 0
        %267 = vperm.xlu0 %266, %v263
        %v268 = vpop.permute.xlu0 %267
        %271 = vset.pattern.permute.xlu0 0
        %272 = vperm.xlu0 %271, %v264
        %v273 = vpop.permute.xlu0 %272
        %v277 = vunpack.c.l.b16 %v253
        %v278 = vunpack.c.l.b16 %v254
        %v279 = vpack.c.b16 %v278, %v277
        %v288 = vunpack.c.l.b16 %v255
        %v289 = vunpack.c.l.b16 %v256
        %v290 = vunpack.c.l.b16 %v257
        %v291 = vunpack.c.l.b16 %v258
        %v292 = vunpack.c.l.b16 %v259
        %v293 = vunpack.c.l.b16 %v260
        %v294 = vunpack.c.l.b16 %v261
        %v295 = vunpack.c.l.b16 %v262
        %v296 = vpack.c.b16 %v289, %v288
        %v297 = vpack.c.b16 %v291, %v290
        %v298 = vpack.c.b16 %v293, %v292
        %v299 = vpack.c.b16 %v295, %v294
        %vm304 = vcmask 523264
        %v306 = vsel %vm304, %v279, 0
        %308 = vmatprep.subr.bf16.mxu0 0
        %309 = vmatpush1.bf16.msra.mxu0 %v296
        %310 = vmatprep.subr.bf16.mxu0 0
        %311 = vmatpush1.bf16.msra.mxu0 %v297
        %312 = vmatprep.subr.bf16.mxu0 0
        %313 = vmatpush1.bf16.msra.mxu0 %v298
        %314 = vmatprep.subr.bf16.mxu0 0
        %315 = vmatpush1.bf16.msra.mxu0 %v299
        %316 = vmatprep.subr.bf16.mxu0 0
        %317 = vmatpush1.bf16.msra.mxu0 0
        %318 = vmatprep.subr.bf16.mxu0 0
        %319 = vmatpush1.bf16.msra.mxu0 0
        %320 = vmatprep.subr.bf16.mxu0 0
        %321 = vmatpush1.bf16.msra.mxu0 0
        %322 = vmatprep.subr.bf16.mxu0 0
        %323 = vmatpush1.bf16.msra.mxu0 0
        %324 = vmatprep.subr.bf16.mxu0 0
        %325 = vmatpush1.bf16.msra.mxu0 0
        %326 = vmatprep.subr.bf16.mxu0 0
        %327 = vmatpush1.bf16.msra.mxu0 0
        %328 = vmatprep.subr.bf16.mxu0 0
        %329 = vmatpush1.bf16.msra.mxu0 0
        %330 = vmatprep.subr.bf16.mxu0 0
        %331 = vmatpush1.bf16.msra.mxu0 0
        %332 = vmatprep.subr.bf16.mxu0 0
        %333 = vmatpush1.bf16.msra.mxu0 0
        %334 = vmatprep.subr.bf16.mxu0 0
        %335 = vmatpush1.bf16.msra.mxu0 0
        %336 = vmatprep.subr.bf16.mxu0 0
        %337 = vmatpush1.bf16.msra.mxu0 0
        %338 = vmatprep.subr.bf16.mxu0 0
        %339 = vmatpush1.bf16.msra.mxu0 0
        %340 = vmatprep.mubr.bf16.mxu0 0
        %341 = vmatmul.mubr.bf16.gmra.mrb[0].mxu0 %v306
        %v342 = vpop.f32.mrb[0].mxu0
        %v343 = vadd.f32 %v268, %v342
        %v344 = vpop.f32.mrb[0].mxu0
        %v345 = vpop.f32.mrb[0].mxu0
        %v346 = vadd.f32 %v273, %v345
        %v347 = vpop.f32.mrb[0].mxu0
        %348 = vdwg.mxu0
        %v349 = vxor.u32 %v343, 2147483648
        %v350 = vxor.u32 %v346, 2147483648
        %v351 = vmul.f32 %v349, 1.442695
        %v352 = vpow.pop %v351
        %v353 = vmul.f32 %v350, 1.442695
        %v354 = vpow.pop %v353
        %v355 = vadd.f32 %v352, 1.0
        %v356 = vadd.f32 %v354, 1.0
        %v357 = vrcp.pop %v355
        %v358 = vmul.f32 1.0, %v357
        %v359 = vrcp.pop %v356
        %v360 = vmul.f32 1.0, %v359
        %v361 = vmul.f32 %v343, %v358
        %v362 = vmul.f32 %v346, %v360
        %363 = vst [vmem:[%s251] sm:$0xff] %v361
        %364 = vst [vmem:[%s251 + $0x8] sm:$0xff] %v362
        %s365 = sand.u32 %s106, 1
        %s366 = sand.u32 %s106, 1
        %s367 = smul.addr %s366, 16
        %s368 = scalar_lea.vmem [#allocation3], %s367
        // Predicated region
        $region74: #{_conv_silu_two_pass.1} parent=68 // pred_check
          %p369 = pneg %p116
        $region75: #{_conv_silu_two_pass.1} parent=68 // pred_check_branch
          %371 = sbr.rel (%p369) target = $region77
        $region76: #{_conv_silu_two_pass.1} parent=68 // pred_region
          %s372 = smul.addr %s18, 4
          %s373 = sadd.s32 %s19, %s372
          %s374 = smul.addr %s373, 8
          %s375 = scalar_lea.vmem %s3, %s374
          // Predicated region
          $region78: #{_conv_silu_two_pass.1} parent=76 // pred_check
            _
          $region79: #{_conv_silu_two_pass.1} parent=76 // pred_check_branch
            %377 = sbr.rel (0) target = $region81
          $region80: #{_conv_silu_two_pass.1} parent=76 // pred_region
            // Predicated region
            $region82: #{_conv_silu_two_pass.1} parent=80 // pred_check
              _
            $region83: #{_conv_silu_two_pass.1} parent=80 // pred_check_branch
              %379 = sbr.rel (0) target = $region85
            $region84: #{_conv_silu_two_pass.1} parent=80 // pred_region
              // Predicated region
              $region97: #{_conv_silu_two_pass.1} parent=84 // pred_check
                _
              $region98: #{_conv_silu_two_pass.1} parent=84 // pred_check_branch
                %396 = sbr.rel (0) target = $region100
              $region99: #{_conv_silu_two_pass.1} parent=84 // pred_region
                loop: start=0, step=1, limit=1
                $region101: #{_conv_silu_two_pass.1} parent=99 // loop_pre_header
                  _
                $region102: #{_conv_silu_two_pass.1} parent=99 // loop_header
                  %s398 = sphi 0, %s402
                  %p399 = scmp.ge.s32.totalorder %s398, 1
                  %s403 = sphi %s368, %s368
                  %s404 = sphi %s375, %s375
                $region103: #{_conv_silu_two_pass.1} parent=99 // loop_header_branch
                  %401 = sbr.rel (%p399) target = $region107
                $region104: #{_conv_silu_two_pass.1} parent=99 // loop_body
                  %v405 = vld [vmem:[%s403] sm:$0xff]
                  %406 = vst [vmem:[%s404] sm:$0xff] %v405
                  %v407 = vld [vmem:[%s403 + $0x8] sm:$0xff]
                  %408 = vst [vmem:[%s404 + $0x10] sm:$0xff] %v407
                $region105: #{_conv_silu_two_pass.1} parent=99 // loop_footer
                  %s402 = sadd.s32 1, %s398
                $region106: #{_conv_silu_two_pass.1} parent=99 // loop_footer_branch
                  %397 = sbr.rel target = $region102
                $region107: #{_conv_silu_two_pass.1} parent=99 // loop_exit
                  _
              $region100: #{_conv_silu_two_pass.1} parent=84 // pred_fallthru
                _
              // Predicated region
              $region108: #{_conv_silu_two_pass.1} parent=84 // pred_check
                _
              $region109: #{_conv_silu_two_pass.1} parent=84 // pred_check_branch
                %410 = sbr.rel target = $region111
              $region110: #{_conv_silu_two_pass.1} parent=84 // pred_region
                _
              $region111: #{_conv_silu_two_pass.1} parent=84 // pred_fallthru
                _
            $region85: #{_conv_silu_two_pass.1} parent=80 // pred_fallthru
              _
            // Predicated region
            $region86: #{_conv_silu_two_pass.1} parent=80 // pred_check
              _
            $region87: #{_conv_silu_two_pass.1} parent=80 // pred_check_branch
              %381 = sbr.rel target = $region89
            $region88: #{_conv_silu_two_pass.1} parent=80 // pred_region
              loop: start=0, step=1, limit=1
              $region90: #{_conv_silu_two_pass.1} parent=88 // loop_pre_header
                _
              $region91: #{_conv_silu_two_pass.1} parent=88 // loop_header
                %s384 = sphi 0, %s388
                %p385 = scmp.ge.s32.totalorder %s384, 1
                %s389 = sphi %s368, %s368
                %s390 = sphi %s375, %s375
              $region92: #{_conv_silu_two_pass.1} parent=88 // loop_header_branch
                %387 = sbr.rel (%p385) target = $region96
              $region93: #{_conv_silu_two_pass.1} parent=88 // loop_body
                %v391 = vld [vmem:[%s389] sm:$0xff]
                %392 = vst [vmem:[%s390] sm:$0xff] %v391
                %v393 = vld [vmem:[%s389 + $0x8] sm:$0xff]
                %394 = vst [vmem:[%s390 + $0x10] sm:$0xff] %v393
              $region94: #{_conv_silu_two_pass.1} parent=88 // loop_footer
                %s388 = sadd.s32 1, %s384
              $region95: #{_conv_silu_two_pass.1} parent=88 // loop_footer_branch
                %383 = sbr.rel target = $region91
              $region96: #{_conv_silu_two_pass.1} parent=88 // loop_exit
                _
            $region89: #{_conv_silu_two_pass.1} parent=80 // pred_fallthru
              _
          $region81: #{_conv_silu_two_pass.1} parent=76 // pred_fallthru
            _
          %411 = vnop
        $region77: #{_conv_silu_two_pass.1} parent=68 // pred_fallthru
          _
      $region69: #{_conv_silu_two_pass.1} parent=5 // pred_fallthru
        _
      %p412 = scmp.le.s32.totalorder 2, %s9
      // Predicated region
      $region112: #{_conv_silu_two_pass.1} parent=5 // pred_check
        %p413 = pneg %p412
      $region113: #{_conv_silu_two_pass.1} parent=5 // pred_check_branch
        %415 = sbr.rel (%p413) target = $region115
      $region114: #{_conv_silu_two_pass.1} parent=5 // pred_region
        %s416 = ssub.s32 %s9, 2
        // Predicated region
        $region116: #{_conv_silu_two_pass.1} parent=114 // pred_check
          %p417 = pneg %p122
        $region117: #{_conv_silu_two_pass.1} parent=114 // pred_check_branch
          %419 = sbr.rel (%p417) target = $region119
        $region118: #{_conv_silu_two_pass.1} parent=114 // pred_region
          %s420 = sand.u32 %s107, 1
          %s421 = sand.u32 %s107, 1
          %s422 = smul.addr %s421, 16
          %s423 = scalar_lea.vmem [#allocation3], %s422
        $region119: #{_conv_silu_two_pass.1} parent=114 // pred_fallthru
          _
      $region115: #{_conv_silu_two_pass.1} parent=5 // pred_fallthru
        _
    $region6: #{_conv_silu_two_pass.1} parent=1 // loop_footer
      %s13 = sadd.s32 1, %s9
    $region7: #{_conv_silu_two_pass.1} parent=1 // loop_footer_branch
      %8 = sbr.rel target = $region3
    $region8: #{_conv_silu_two_pass.1} parent=1 // loop_exit
      _

</llo_original>
